<compile_context>
chip_gen: v6e
topology: v6e:2x2x1
jax: 0.10.0
libtpu: 0.0.40
codegen_flags: <defaults>
</compile_context>

<pallas_src>
import math

import jax
import jax.numpy as jnp
from jax.experimental import pallas as pl
from jax.experimental.pallas import tpu as pltpu


D_IN = 768        # image/text embedding dim
D_HID = 256       # fc1 output dim
D_OUT = 13        # number of classes
D_OUT_PAD = 128   # lane-dense padded classifier width


# ----------------------------------------------------------------------------
# Kernel: normalize -> gated fusion -> W -> relu -> fc1(+folded BN) -> cls.
# Processes one (TM, 768) batch tile per grid step; weights are replicated.
# ----------------------------------------------------------------------------
def _fusion_kernel(img_ref, txt_ref, w_t_ref, w1_t_ref, b1_ref,
                   wc_t_ref, bc_ref, out_ref):
    img = img_ref[...].astype(jnp.float32)          # (TM, 768)
    txt = txt_ref[...].astype(jnp.float32)          # (TM, 768)

    # torch.nn.functional.normalize(x, p=2, dim=1): x / max(||x||_2, 1e-12)
    # == x * rsqrt(max(sum(x^2), 1e-24)); rsqrt goes to the EUP slot.
    eps2 = jnp.float32(1e-24)
    inv_img = jax.lax.rsqrt(
        jnp.maximum(jnp.sum(img * img, axis=1, keepdims=True), eps2))
    inv_txt = jax.lax.rsqrt(
        jnp.maximum(jnp.sum(txt * txt, axis=1, keepdims=True), eps2))

    # element-wise gated fusion (f32 on the VPU)
    xvt = (img * inv_img) * (txt * inv_txt)         # (TM, 768)

    # relu(Xvt @ W.T)  — W.T pre-transposed + pre-cast to bf16 in the wrapper
    h = jnp.dot(xvt.astype(jnp.bfloat16), w_t_ref[...],
                preferred_element_type=jnp.float32)
    h = jnp.maximum(h, 0.0)                         # (TM, 768)

    # fc1 with folded BatchNorm1d (eval); dropout = identity at inference
    h1 = jnp.dot(h.astype(jnp.bfloat16), w1_t_ref[...],
                 preferred_element_type=jnp.float32)
    h1 = h1 + b1_ref[...]                           # (TM, 256)

    # classifier: Linear(256 -> 13), padded to 128 output lanes
    out = jnp.dot(h1.astype(jnp.bfloat16), wc_t_ref[...],
                  preferred_element_type=jnp.float32)
    out = out + bc_ref[...]                         # (TM, 128)

    out_ref[...] = out.astype(out_ref.dtype)


# ----------------------------------------------------------------------------
# Wrapper: parameter folding / transposition / padding (glue) + pallas_call.
# ----------------------------------------------------------------------------
def easyqa_mid_fusion_forward(image_emb, text_emb, params):
    B = image_emb.shape[0]

    # ---- batch tiling: pad B up to a multiple of the tile size --------------
    TM = 256 if B >= 256 else max(8, ((B + 7) // 8) * 8)
    n_tiles = pl.cdiv(B, TM)
    B_pad = n_tiles * TM
    if B_pad != B:
        pad = ((0, B_pad - B), (0, 0))
        image_emb = jnp.pad(image_emb, pad)   # zero rows normalize to zero (no NaN)
        text_emb = jnp.pad(text_emb, pad)

    # ---- weights: transpose, fold BN into fc1, pad classifier, cast bf16 ----
    w_t = params["W"].T.astype(jnp.bfloat16)                       # (768, 768)

    bn_eps = 1e-5
    inv_std = 1.0 / jnp.sqrt(params["bn_var"] + bn_eps)
    bn_scale = params["bn_gamma"] * inv_std                        # (256,)
    bn_bias = params["bn_beta"] - params["bn_mean"] * bn_scale     # (256,)
    w1_t = (params["fc1_w"].T * bn_scale[None, :]).astype(jnp.bfloat16)  # (768, 256)
    b1 = (params["fc1_b"] * bn_scale + bn_bias).reshape(1, -1).astype(jnp.float32)

    wc_t = jnp.zeros((D_HID, D_OUT_PAD), jnp.float32)
    wc_t = wc_t.at[:, :D_OUT].set(params["cls_w"].T).astype(jnp.bfloat16)
    bc = jnp.zeros((1, D_OUT_PAD), jnp.float32).at[:, :D_OUT].set(params["cls_b"])

    # ---- specs ---------------------------------------------------------------
    in_specs = [
        pl.BlockSpec((TM, D_IN), lambda i: (i, 0)),          # image tile
        pl.BlockSpec((TM, D_IN), lambda i: (i, 0)),          # text tile
        pl.BlockSpec((D_IN, D_IN), lambda i: (0, 0)),        # W.T (replicated)
        pl.BlockSpec((D_IN, D_HID), lambda i: (0, 0)),       # fc1.T * bn_scale
        pl.BlockSpec((1, D_HID), lambda i: (0, 0)),          # folded bias
        pl.BlockSpec((D_HID, D_OUT_PAD), lambda i: (0, 0)),  # cls.T padded
        pl.BlockSpec((1, D_OUT_PAD), lambda i: (0, 0)),      # cls bias padded
    ]
    out_specs = pl.BlockSpec((TM, D_OUT_PAD), lambda i: (i, 0))

    flops = 2 * B_pad * (D_IN * D_IN + D_IN * D_HID + D_HID * D_OUT_PAD)
    bytes_accessed = (
        2 * B_pad * D_IN * 4                                        # inputs (f32)
        + (D_IN * D_IN + D_IN * D_HID + D_HID * D_OUT_PAD) * 2      # weights (bf16)
        + (D_HID + D_OUT_PAD) * 4                                   # biases
        + B_pad * D_OUT_PAD * 4                                     # output
    )
    cost = pl.CostEstimate(flops=flops, transcendentals=2 * B_pad,
                           bytes_accessed=bytes_accessed)

    out_padded = pl.pallas_call(
        _fusion_kernel,
        out_shape=jax.ShapeDtypeStruct((B_pad, D_OUT_PAD), jnp.float32),
        grid_spec=pltpu.PrefetchScalarGridSpec(
            num_scalar_prefetch=0,
            grid=(n_tiles,),
            in_specs=in_specs,
            out_specs=out_specs,
        ),
        compiler_params=pltpu.CompilerParams(
            dimension_semantics=("parallel",)),   # shards batch tiles on v7x's 2 TCs
        cost_estimate=cost,
    )(image_emb, text_emb, w_t, w1_t, b1, wc_t, bc)

    return out_padded[:B, :D_OUT]


# ----------------------------------------------------------------------------
# Deterministic parameter initialization (matches shapes / init distributions
# of the PyTorch module; not bit-identical RNG, which is irrelevant here).
# ----------------------------------------------------------------------------
def init_params(key):
    ks = jax.random.split(key, 6)

    def kaiming_uniform(k, out_f, in_f):
        bound = 1.0 / math.sqrt(in_f)
        return jax.random.uniform(k, (out_f, in_f), jnp.float32, -bound, bound)

    def linear_bias(k, out_f, in_f):
        bound = 1.0 / math.sqrt(in_f)
        return jax.random.uniform(k, (out_f,), jnp.float32, -bound, bound)

    return {
        "W":        kaiming_uniform(ks[0], D_IN, D_IN),     # nn.Parameter(768, 768)
        "fc1_w":    kaiming_uniform(ks[1], D_HID, D_IN),    # Linear(768, 256).weight
        "fc1_b":    linear_bias(ks[2], D_HID, D_IN),
        "cls_w":    kaiming_uniform(ks[3], D_OUT, D_HID),   # Linear(256, 13).weight
        "cls_b":    linear_bias(ks[4], D_OUT, D_HID),
        "bn_gamma": jnp.ones((D_HID,), jnp.float32),
        "bn_beta":  jnp.zeros((D_HID,), jnp.float32),
        "bn_mean":  jnp.zeros((D_HID,), jnp.float32),
        "bn_var":   jnp.ones((D_HID,), jnp.float32),
    }


def _reference(image_emb, text_emb, params):
    """Pure-JAX f32 reference (eval-mode BN, identity dropout)."""
    eps = 1e-12
    xv = image_emb / jnp.maximum(
        jnp.linalg.norm(image_emb, axis=1, keepdims=True), eps)
    xt = text_emb / jnp.maximum(
        jnp.linalg.norm(text_emb, axis=1, keepdims=True), eps)
    h = jnp.maximum((xv * xt) @ params["W"].T, 0.0)
    h = h @ params["fc1_w"].T + params["fc1_b"]
    h = (h - params["bn_mean"]) / jnp.sqrt(params["bn_var"] + 1e-5)
    h = h * params["bn_gamma"] + params["bn_beta"]
    return h @ params["cls_w"].T + params["cls_b"]


if __name__ == "__main__":
    key = jax.random.PRNGKey(0)
    k_img, k_txt, k_params = jax.random.split(key, 3)

    B = 8  # batch; feature dims are fixed by the module (768 -> 256 -> 13)
    image_emb = jax.random.normal(k_img, (B, D_IN), jnp.float32)
    text_emb = jax.random.normal(k_txt, (B, D_IN), jnp.float32)
    params = init_params(k_params)

    out = easyqa_mid_fusion_forward(image_emb, text_emb, params)
    out = jax.block_until_ready(out)

    ref = _reference(image_emb, text_emb, params)
    assert out.shape == (B, D_OUT)
    # bf16 matmul operands (f32 accumulation) -> slightly looser tolerance.
    assert jnp.allclose(out, ref, atol=3e-3, rtol=3e-2), \
        float(jnp.max(jnp.abs(out - ref)))

    print("KERNEL_OK")
</pallas_src>

<mosaic_0001>
module attributes {stable_mosaic.version = 11 : i64} {
  func.func @_fusion_kernel(%arg0: i32, %arg1: memref<8x768xf32, #tpu.memory_space<vmem>>, %arg2: memref<8x768xf32, #tpu.memory_space<vmem>>, %arg3: memref<768x768xbf16, #tpu.memory_space<vmem>>, %arg4: memref<768x256xbf16, #tpu.memory_space<vmem>>, %arg5: memref<1x256xf32, #tpu.memory_space<vmem>>, %arg6: memref<256x128xbf16, #tpu.memory_space<vmem>>, %arg7: memref<1x128xf32, #tpu.memory_space<vmem>>, %arg8: memref<8x128xf32, #tpu.memory_space<vmem>>) attributes {dimension_semantics = [#tpu.dimension_semantics<parallel>], iteration_bounds = array<i64: 1>, scalar_prefetch = 0 : i64, scratch_operands = 0 : i64, tpu.core_type = #tpu.core_type<tc>, window_params = [{transform_indices = @transform_0, window_bounds = array<i64: 8, 768>}, {transform_indices = @transform_1, window_bounds = array<i64: 8, 768>}, {pipeline_mode = #tpu.pipeline_mode<synchronous>, transform_indices = @transform_2, window_bounds = array<i64: 768, 768>}, {pipeline_mode = #tpu.pipeline_mode<synchronous>, transform_indices = @transform_3, window_bounds = array<i64: 768, 256>}, {pipeline_mode = #tpu.pipeline_mode<synchronous>, transform_indices = @transform_4, window_bounds = array<i64: 1, 256>}, {pipeline_mode = #tpu.pipeline_mode<synchronous>, transform_indices = @transform_5, window_bounds = array<i64: 256, 128>}, {pipeline_mode = #tpu.pipeline_mode<synchronous>, transform_indices = @transform_6, window_bounds = array<i64: 1, 128>}, {transform_indices = @transform_7, window_bounds = array<i64: 8, 128>}]} {
    %c0 = arith.constant 0 : index
    %c0_0 = arith.constant 0 : index
    %0 = vector.load %arg1[%c0, %c0_0] : memref<8x768xf32, #tpu.memory_space<vmem>>, vector<8x768xf32>
    %c0_1 = arith.constant 0 : index
    %c0_2 = arith.constant 0 : index
    %1 = vector.load %arg2[%c0_1, %c0_2] : memref<8x768xf32, #tpu.memory_space<vmem>>, vector<8x768xf32>
    %2 = arith.mulf %0, %0 : vector<8x768xf32>
    %cst = arith.constant dense<0.000000e+00> : vector<8xf32>
    %3 = vector.multi_reduction <add>, %2, %cst [1] : vector<8x768xf32> to vector<8xf32>
    %4 = vector.shape_cast %3 : vector<8xf32> to vector<8x1xf32>
    %cst_3 = arith.constant 1.000000e-24 : f32
    %5 = vector.broadcast %cst_3 : f32 to vector<8x1xf32>
    %6 = arith.maximumf %4, %5 : vector<8x1xf32>
    %7 = math.rsqrt %6 : vector<8x1xf32>
    %8 = arith.mulf %1, %1 : vector<8x768xf32>
    %cst_4 = arith.constant dense<0.000000e+00> : vector<8xf32>
    %9 = vector.multi_reduction <add>, %8, %cst_4 [1] : vector<8x768xf32> to vector<8xf32>
    %10 = vector.shape_cast %9 : vector<8xf32> to vector<8x1xf32>
    %cst_5 = arith.constant 1.000000e-24 : f32
    %11 = vector.broadcast %cst_5 : f32 to vector<8x1xf32>
    %12 = arith.maximumf %10, %11 : vector<8x1xf32>
    %13 = math.rsqrt %12 : vector<8x1xf32>
    %14 = vector.broadcast %7 : vector<8x1xf32> to vector<8x768xf32>
    %15 = arith.mulf %0, %14 : vector<8x768xf32>
    %16 = vector.broadcast %13 : vector<8x1xf32> to vector<8x768xf32>
    %17 = arith.mulf %1, %16 : vector<8x768xf32>
    %18 = arith.mulf %15, %17 : vector<8x768xf32>
    %19 = arith.truncf %18 : vector<8x768xf32> to vector<8x768xbf16>
    %c0_6 = arith.constant 0 : index
    %c0_7 = arith.constant 0 : index
    %20 = vector.load %arg3[%c0_6, %c0_7] : memref<768x768xbf16, #tpu.memory_space<vmem>>, vector<768x768xbf16>
    %cst_8 = arith.constant dense<0.000000e+00> : vector<8x768xf32>
    %21 = tpu.matmul %19, %20, %cst_8 {dimension_numbers = #tpu.dot_dimension_numbers<[1], [0], [0], [1], [0, 0, 1, 1], [], []>} : vector<8x768xbf16>, vector<768x768xbf16>, vector<8x768xf32> -> vector<8x768xf32>
    %cst_9 = arith.constant 0.000000e+00 : f32
    %22 = vector.broadcast %cst_9 : f32 to vector<8x768xf32>
    %23 = arith.maximumf %21, %22 : vector<8x768xf32>
    %24 = arith.truncf %23 : vector<8x768xf32> to vector<8x768xbf16>
    %c0_10 = arith.constant 0 : index
    %c0_11 = arith.constant 0 : index
    %25 = vector.load %arg4[%c0_10, %c0_11] : memref<768x256xbf16, #tpu.memory_space<vmem>>, vector<768x256xbf16>
    %cst_12 = arith.constant dense<0.000000e+00> : vector<8x256xf32>
    %26 = tpu.matmul %24, %25, %cst_12 {dimension_numbers = #tpu.dot_dimension_numbers<[1], [0], [0], [1], [0, 0, 1, 1], [], []>} : vector<8x768xbf16>, vector<768x256xbf16>, vector<8x256xf32> -> vector<8x256xf32>
    %c0_13 = arith.constant 0 : index
    %c0_14 = arith.constant 0 : index
    %27 = vector.load %arg5[%c0_13, %c0_14] : memref<1x256xf32, #tpu.memory_space<vmem>>, vector<1x256xf32>
    %28 = vector.broadcast %27 : vector<1x256xf32> to vector<8x256xf32>
    %29 = arith.addf %26, %28 : vector<8x256xf32>
    %30 = arith.truncf %29 : vector<8x256xf32> to vector<8x256xbf16>
    %c0_15 = arith.constant 0 : index
    %c0_16 = arith.constant 0 : index
    %31 = vector.load %arg6[%c0_15, %c0_16] : memref<256x128xbf16, #tpu.memory_space<vmem>>, vector<256x128xbf16>
    %cst_17 = arith.constant dense<0.000000e+00> : vector<8x128xf32>
    %32 = tpu.matmul %30, %31, %cst_17 {dimension_numbers = #tpu.dot_dimension_numbers<[1], [0], [0], [1], [0, 0, 1, 1], [], []>} : vector<8x256xbf16>, vector<256x128xbf16>, vector<8x128xf32> -> vector<8x128xf32>
    %c0_18 = arith.constant 0 : index
    %c0_19 = arith.constant 0 : index
    %33 = vector.load %arg7[%c0_18, %c0_19] : memref<1x128xf32, #tpu.memory_space<vmem>>, vector<1x128xf32>
    %34 = vector.broadcast %33 : vector<1x128xf32> to vector<8x128xf32>
    %35 = arith.addf %32, %34 : vector<8x128xf32>
    %c0_20 = arith.constant 0 : index
    %c0_21 = arith.constant 0 : index
    %36 = vector.load %arg8[%c0_20, %c0_21] : memref<8x128xf32, #tpu.memory_space<vmem>>, vector<8x128xf32>
    tpu.vector_store %arg8[%c0_20, %c0_21], %35 {strides = array<i32>} : memref<8x128xf32, #tpu.memory_space<vmem>>, vector<8x128xf32>,
    return
  }
  func.func @transform_0(%arg0: i32) -> (i32, i32) {
    %c0_i32 = arith.constant 0 : i32
    %c0_i32_0 = arith.constant 0 : i32
    return %arg0, %c0_i32 : i32, i32
  }
  func.func @transform_1(%arg0: i32) -> (i32, i32) {
    %c0_i32 = arith.constant 0 : i32
    %c0_i32_0 = arith.constant 0 : i32
    return %arg0, %c0_i32 : i32, i32
  }
  func.func @transform_2(%arg0: i32) -> (i32, i32) {
    %c0_i32 = arith.constant 0 : i32
    %c0_i32_0 = arith.constant 0 : i32
    %c0_i32_1 = arith.constant 0 : i32
    return %c0_i32, %c0_i32_0 : i32, i32
  }
  func.func @transform_3(%arg0: i32) -> (i32, i32) {
    %c0_i32 = arith.constant 0 : i32
    %c0_i32_0 = arith.constant 0 : i32
    %c0_i32_1 = arith.constant 0 : i32
    return %c0_i32, %c0_i32_0 : i32, i32
  }
  func.func @transform_4(%arg0: i32) -> (i32, i32) {
    %c0_i32 = arith.constant 0 : i32
    %c0_i32_0 = arith.constant 0 : i32
    %c0_i32_1 = arith.constant 0 : i32
    return %c0_i32, %c0_i32_0 : i32, i32
  }
  func.func @transform_5(%arg0: i32) -> (i32, i32) {
    %c0_i32 = arith.constant 0 : i32
    %c0_i32_0 = arith.constant 0 : i32
    %c0_i32_1 = arith.constant 0 : i32
    return %c0_i32, %c0_i32_0 : i32, i32
  }
  func.func @transform_6(%arg0: i32) -> (i32, i32) {
    %c0_i32 = arith.constant 0 : i32
    %c0_i32_0 = arith.constant 0 : i32
    %c0_i32_1 = arith.constant 0 : i32
    return %c0_i32, %c0_i32_0 : i32, i32
  }
  func.func @transform_7(%arg0: i32) -> (i32, i32) {
    %c0_i32 = arith.constant 0 : i32
    %c0_i32_0 = arith.constant 0 : i32
    return %arg0, %c0_i32 : i32, i32
  }
}

</mosaic_0001>

<llo_original>
// kernel: tpu_custom_call.1
$region0: #{tpu_custom_call.1}
  #allocation0 [shape = 'u32[]', space=smem, size = 0x4, offset = 0x4, fixed_abs, tag = 'smem constant byte address 0x4 - core index']
  #allocation1 [shape = 'u32[144,128]{1,0:T(1,128)}', space=vmem, size = 0x12000, scoped, tag = 'internal scratch']
  %s0 = inlined_call_operand.hbm [shape: f32[8,768], index: 0, kind: input, shape index: {}]
  %s1 = inlined_call_operand.hbm [shape: f32[8,768], index: 1, kind: input, shape index: {}]
  %s2 = inlined_call_operand.hbm [shape: bf16[768,768], index: 2, kind: input, shape index: {}]
  %s3 = inlined_call_operand.hbm [shape: bf16[768,256], index: 3, kind: input, shape index: {}]
  %s4 = inlined_call_operand.hbm [shape: f32[1,256], index: 4, kind: input, shape index: {}]
  %s5 = inlined_call_operand.hbm [shape: bf16[256,128], index: 5, kind: input, shape index: {}]
  %s6 = inlined_call_operand.hbm [shape: f32[1,128], index: 6, kind: input, shape index: {}]
  %s7 = inlined_call_operand.hbm [shape: f32[8,128], index: 7, kind: output, shape index: {}]
  %s8 = sld [smem:[#allocation0]]
  $region66: #{tpu_custom_call.1} parent=0
    _
  %s10 = ssub.s32 1, %s8
  %s11 = scalar_select 0, %s10, %s8
  $region1: #{tpu_custom_call.1} parent=0
    #allocation2 [shape = 'u8[24576]{0}', space=vmem, size = 0x6000, scoped, tag = 'input window, operand 0, single buffered']
    #allocation3 [shape = 's32[1]{0}', space=sflag, size = 0x4, scoped, tag = 'scoped memory for tpu_custom_call.1']
    #allocation4 [shape = 's32[1]{0}', space=sflag, size = 0x4, scoped, tag = 'scoped memory for tpu_custom_call.1']
    #allocation5 [shape = 'u8[24576]{0}', space=vmem, size = 0x6000, scoped, tag = 'input window, operand 1, single buffered']
    #allocation6 [shape = 's32[1]{0}', space=sflag, size = 0x4, scoped, tag = 'scoped memory for tpu_custom_call.1']
    #allocation7 [shape = 'u8[1179648]{0}', space=vmem, size = 0x120000, scoped, tag = 'input window, operand 2, single buffered']
    #allocation8 [shape = 'u8[393216]{0}', space=vmem, size = 0x60000, scoped, tag = 'input window, operand 3, single buffered']
    #allocation9 [shape = 's32[1]{0}', space=sflag, size = 0x4, scoped, tag = 'scoped memory for tpu_custom_call.1']
    #allocation10 [shape = 'u8[1024]{0}', space=vmem, size = 0x400, scoped, tag = 'input window, operand 4, single buffered']
    #allocation11 [shape = 'u8[65536]{0}', space=vmem, size = 0x10000, scoped, tag = 'input window, operand 5, single buffered']
    #allocation12 [shape = 's32[1]{0}', space=sflag, size = 0x4, scoped, tag = 'scoped memory for tpu_custom_call.1']
    #allocation13 [shape = 'u8[512]{0}', space=vmem, size = 0x400, scoped, tag = 'input window, operand 6, single buffered']
    #allocation14 [shape = 'u8[4096]{0}', space=vmem, size = 0x1000, scoped, tag = 'output window, operand 0, single buffered']
    %12 = vsyncpa [#allocation3], 0
    %13 = vsyncpa [#allocation6], 0
    %14 = vsyncpa [#allocation9], 0
    %15 = vsyncpa [#allocation12], 0
    %16 = vsyncpa [#allocation4], 0
    // Predicated region
    $region2: #{tpu_custom_call.1} parent=1 // pred_check
      _
    $region3: #{tpu_custom_call.1} parent=1 // pred_check_branch
      %18 = sbr.rel (0) target = $region5
    $region4: #{tpu_custom_call.1} parent=1 // pred_region
      %s20 = ssub.s32 768, 768
      %21 = vsyncadd [#allocation3], %s20
      %s23 = sshll.u32 [#allocation2], 4
      %s24 = int_to_ptr.vmem [resolvable:$true] %s23
      %26 = dma.hbm_to_vmem [thread:$0]  %s0, 768, %s24, [#allocation3]
    $region5: #{tpu_custom_call.1} parent=1 // pred_fallthru
      _
    // Predicated region
    $region6: #{tpu_custom_call.1} parent=1 // pred_check
      _
    $region7: #{tpu_custom_call.1} parent=1 // pred_check_branch
      %28 = sbr.rel (0) target = $region9
    $region8: #{tpu_custom_call.1} parent=1 // pred_region
      %s30 = ssub.s32 768, 768
      %31 = vsyncadd [#allocation6], %s30
      %s33 = sshll.u32 [#allocation5], 4
      %s34 = int_to_ptr.vmem [resolvable:$true] %s33
      %36 = dma.hbm_to_vmem [thread:$0]  %s1, 768, %s34, [#allocation6]
    $region9: #{tpu_custom_call.1} parent=1 // pred_fallthru
      _
    // Predicated region
    $region10: #{tpu_custom_call.1} parent=1 // pred_check
      _
    $region11: #{tpu_custom_call.1} parent=1 // pred_check_branch
      %38 = sbr.rel (0) target = $region13
    $region12: #{tpu_custom_call.1} parent=1 // pred_region
      %s40 = ssub.s32 36864, 36864
      %41 = vsyncadd [#allocation6], %s40
      %s42 = sshll.u32 [#allocation7], 4
      %s43 = int_to_ptr.vmem [resolvable:$true] %s42
      %48 = dma.hbm_to_vmem [thread:$0]  %s2, 36864, %s43, [#allocation6], 384, 384, 24
    $region13: #{tpu_custom_call.1} parent=1 // pred_fallthru
      _
    // Predicated region
    $region14: #{tpu_custom_call.1} parent=1 // pred_check
      _
    $region15: #{tpu_custom_call.1} parent=1 // pred_check_branch
      %50 = sbr.rel (0) target = $region17
    $region16: #{tpu_custom_call.1} parent=1 // pred_region
      %s52 = ssub.s32 12288, 12288
      %53 = vsyncadd [#allocation9], %s52
      %s54 = sshll.u32 [#allocation8], 4
      %s55 = int_to_ptr.vmem [resolvable:$true] %s54
      %60 = dma.hbm_to_vmem [thread:$0]  %s3, 12288, %s55, [#allocation9], 128, 128, 8
    $region17: #{tpu_custom_call.1} parent=1 // pred_fallthru
      _
    // Predicated region
    $region18: #{tpu_custom_call.1} parent=1 // pred_check
      _
    $region19: #{tpu_custom_call.1} parent=1 // pred_check_branch
      %62 = sbr.rel (0) target = $region21
    $region20: #{tpu_custom_call.1} parent=1 // pred_region
      %s64 = ssub.s32 32, 32
      %65 = vsyncadd [#allocation9], %s64
      %s67 = sshll.u32 [#allocation10], 4
      %s68 = int_to_ptr.vmem [resolvable:$true] %s67
      %70 = dma.hbm_to_vmem [thread:$0]  %s4, 32, %s68, [#allocation9]
    $region21: #{tpu_custom_call.1} parent=1 // pred_fallthru
      _
    // Predicated region
    $region22: #{tpu_custom_call.1} parent=1 // pred_check
      _
    $region23: #{tpu_custom_call.1} parent=1 // pred_check_branch
      %72 = sbr.rel (0) target = $region25
    $region24: #{tpu_custom_call.1} parent=1 // pred_region
      %s74 = ssub.s32 2048, 2048
      %75 = vsyncadd [#allocation12], %s74
      %s76 = sshll.u32 [#allocation11], 4
      %s77 = int_to_ptr.vmem [resolvable:$true] %s76
      %82 = dma.hbm_to_vmem [thread:$0]  %s5, 2048, %s77, [#allocation12], 64, 64, 4
    $region25: #{tpu_custom_call.1} parent=1 // pred_fallthru
      _
    // Predicated region
    $region26: #{tpu_custom_call.1} parent=1 // pred_check
      _
    $region27: #{tpu_custom_call.1} parent=1 // pred_check_branch
      %84 = sbr.rel (0) target = $region29
    $region28: #{tpu_custom_call.1} parent=1 // pred_region
      %s86 = ssub.s32 16, 16
      %87 = vsyncadd [#allocation12], %s86
      %s89 = sshll.u32 [#allocation13], 4
      %s90 = int_to_ptr.vmem [resolvable:$true] %s89
      %92 = dma.hbm_to_vmem [thread:$0]  %s6, 16, %s90, [#allocation12]
    $region29: #{tpu_custom_call.1} parent=1 // pred_fallthru
      _
    // Predicated region
    $region30: #{tpu_custom_call.1} parent=1 // pred_check
      _
    $region31: #{tpu_custom_call.1} parent=1 // pred_check_branch
      %94 = sbr.rel (0) target = $region33
    $region32: #{tpu_custom_call.1} parent=1 // pred_region
      %95 = dma.done [#allocation3], 768
    $region33: #{tpu_custom_call.1} parent=1 // pred_fallthru
      _
    // Predicated region
    $region34: #{tpu_custom_call.1} parent=1 // pred_check
      _
    $region35: #{tpu_custom_call.1} parent=1 // pred_check_branch
      %97 = sbr.rel (0) target = $region37
    $region36: #{tpu_custom_call.1} parent=1 // pred_region
      %98 = dma.done [#allocation6], 768
    $region37: #{tpu_custom_call.1} parent=1 // pred_fallthru
      _
    // Predicated region
    $region38: #{tpu_custom_call.1} parent=1 // pred_check
      _
    $region39: #{tpu_custom_call.1} parent=1 // pred_check_branch
      %100 = sbr.rel (0) target = $region41
    $region40: #{tpu_custom_call.1} parent=1 // pred_region
      %101 = dma.done [#allocation6], 36864
    $region41: #{tpu_custom_call.1} parent=1 // pred_fallthru
      _
    // Predicated region
    $region42: #{tpu_custom_call.1} parent=1 // pred_check
      _
    $region43: #{tpu_custom_call.1} parent=1 // pred_check_branch
      %103 = sbr.rel (0) target = $region45
    $region44: #{tpu_custom_call.1} parent=1 // pred_region
      %104 = dma.done [#allocation9], 12288
    $region45: #{tpu_custom_call.1} parent=1 // pred_fallthru
      _
    // Predicated region
    $region46: #{tpu_custom_call.1} parent=1 // pred_check
      _
    $region47: #{tpu_custom_call.1} parent=1 // pred_check_branch
      %106 = sbr.rel (0) target = $region49
    $region48: #{tpu_custom_call.1} parent=1 // pred_region
      %107 = dma.done [#allocation9], 32
    $region49: #{tpu_custom_call.1} parent=1 // pred_fallthru
      _
    // Predicated region
    $region50: #{tpu_custom_call.1} parent=1 // pred_check
      _
    $region51: #{tpu_custom_call.1} parent=1 // pred_check_branch
      %109 = sbr.rel (0) target = $region53
    $region52: #{tpu_custom_call.1} parent=1 // pred_region
      %110 = dma.done [#allocation12], 2048
    $region53: #{tpu_custom_call.1} parent=1 // pred_fallthru
      _
    // Predicated region
    $region54: #{tpu_custom_call.1} parent=1 // pred_check
      _
    $region55: #{tpu_custom_call.1} parent=1 // pred_check_branch
      %112 = sbr.rel (0) target = $region57
    $region56: #{tpu_custom_call.1} parent=1 // pred_region
      %113 = dma.done [#allocation12], 16
    $region57: #{tpu_custom_call.1} parent=1 // pred_fallthru
      _
    %v115 = vld [vmem:[#allocation2] sm:$0xff]
    %v116 = vld [vmem:[#allocation2 + $0x8] sm:$0xff]
    %v117 = vld [vmem:[#allocation2 + $0x10] sm:$0xff]
    %v118 = vld [vmem:[#allocation2 + $0x18] sm:$0xff]
    %v119 = vld [vmem:[#allocation2 + $0x20] sm:$0xff]
    %v120 = vld [vmem:[#allocation2 + $0x28] sm:$0xff]
    %v121 = vld [vmem:[#allocation5] sm:$0xff]
    %v122 = vld [vmem:[#allocation5 + $0x8] sm:$0xff]
    %v123 = vld [vmem:[#allocation5 + $0x10] sm:$0xff]
    %v124 = vld [vmem:[#allocation5 + $0x18] sm:$0xff]
    %v125 = vld [vmem:[#allocation5 + $0x20] sm:$0xff]
    %v126 = vld [vmem:[#allocation5 + $0x28] sm:$0xff]
    %v127 = vmul.f32 %v115, %v115
    %v128 = vmul.f32 %v116, %v116
    %v129 = vmul.f32 %v117, %v117
    %v130 = vmul.f32 %v118, %v118
    %v131 = vmul.f32 %v119, %v119
    %v132 = vmul.f32 %v120, %v120
    %v133 = vadd.f32 %v127, %v128
    %v134 = vadd.f32 %v133, %v129
    %v135 = vadd.f32 %v134, %v130
    %v136 = vadd.f32 %v135, %v131
    %v137 = vadd.f32 %v136, %v132
    %138 = vadd.xlane.f32.xlu0 %v137
    %v139 = vpop.xlane.xlu0 %138
    %v140 = vmax.f32 %v139, 1e-24
    %v141 = vrsqrt.pop %v140
    %v142 = vmul.f32 %v121, %v121
    %v143 = vmul.f32 %v122, %v122
    %v144 = vmul.f32 %v123, %v123
    %v145 = vmul.f32 %v124, %v124
    %v146 = vmul.f32 %v125, %v125
    %v147 = vmul.f32 %v126, %v126
    %v148 = vadd.f32 %v142, %v143
    %v149 = vadd.f32 %v148, %v144
    %v150 = vadd.f32 %v149, %v145
    %v151 = vadd.f32 %v150, %v146
    %v152 = vadd.f32 %v151, %v147
    %153 = vadd.xlane.f32.xlu0 %v152
    %v154 = vpop.xlane.xlu0 %153
    %v155 = vmax.f32 %v154, 1e-24
    %v156 = vrsqrt.pop %v155
    %v157 = vmul.f32 %v115, %v141
    %v158 = vmul.f32 %v116, %v141
    %v159 = vmul.f32 %v117, %v141
    %v160 = vmul.f32 %v118, %v141
    %v161 = vmul.f32 %v119, %v141
    %v162 = vmul.f32 %v120, %v141
    %v163 = vmul.f32 %v121, %v156
    %v164 = vmul.f32 %v122, %v156
    %v165 = vmul.f32 %v123, %v156
    %v166 = vmul.f32 %v124, %v156
    %v167 = vmul.f32 %v125, %v156
    %v168 = vmul.f32 %v126, %v156
    %v169 = vmul.f32 %v157, %v163
    %v170 = vmul.f32 %v158, %v164
    %v171 = vmul.f32 %v159, %v165
    %v172 = vmul.f32 %v160, %v166
    %v173 = vmul.f32 %v161, %v167
    %v174 = vmul.f32 %v162, %v168
    %v175 = vpack.c.bf16 %v169, %v169
    %v176 = vpack.c.bf16 %v170, %v170
    %v177 = vpack.c.bf16 %v171, %v171
    %v178 = vpack.c.bf16 %v172, %v172
    %v179 = vpack.c.bf16 %v173, %v173
    %v180 = vpack.c.bf16 %v174, %v174
    %v181 = vld [vmem:[#allocation7] sm:$0xff]
    %v182 = vld [vmem:[#allocation7 + $0x8] sm:$0xff]
    %v183 = vld [vmem:[#allocation7 + $0x10] sm:$0xff]
    %v184 = vld [vmem:[#allocation7 + $0x18] sm:$0xff]
    %v185 = vld [vmem:[#allocation7 + $0x20] sm:$0xff]
    %v186 = vld [vmem:[#allocation7 + $0x28] sm:$0xff]
    %v187 = vld [vmem:[#allocation7 + $0x30] sm:$0xff]
    %v188 = vld [vmem:[#allocation7 + $0x38] sm:$0xff]
    %v189 = vld [vmem:[#allocation7 + $0x40] sm:$0xff]
    %v190 = vld [vmem:[#allocation7 + $0x48] sm:$0xff]
    %v191 = vld [vmem:[#allocation7 + $0x50] sm:$0xff]
    %v192 = vld [vmem:[#allocation7 + $0x58] sm:$0xff]
    %v193 = vld [vmem:[#allocation7 + $0x60] sm:$0xff]
    %v194 = vld [vmem:[#allocation7 + $0x68] sm:$0xff]
    %v195 = vld [vmem:[#allocation7 + $0x70] sm:$0xff]
    %v196 = vld [vmem:[#allocation7 + $0x78] sm:$0xff]
    %v197 = vld [vmem:[#allocation7 + $0x80] sm:$0xff]
    %v198 = vld [vmem:[#allocation7 + $0x88] sm:$0xff]
    %v199 = vld [vmem:[#allocation7 + $0x90] sm:$0xff]
    %v200 = vld [vmem:[#allocation7 + $0x98] sm:$0xff]
    %v201 = vld [vmem:[#allocation7 + $0xa0] sm:$0xff]
    %v202 = vld [vmem:[#allocation7 + $0xa8] sm:$0xff]
    %v203 = vld [vmem:[#allocation7 + $0xb0] sm:$0xff]
    %v204 = vld [vmem:[#allocation7 + $0xb8] sm:$0xff]
    %v205 = vld [vmem:[#allocation7 + $0xc0] sm:$0xff]
    %v206 = vld [vmem:[#allocation7 + $0xc8] sm:$0xff]
    %v207 = vld [vmem:[#allocation7 + $0xd0] sm:$0xff]
    %v208 = vld [vmem:[#allocation7 + $0xd8] sm:$0xff]
    %v209 = vld [vmem:[#allocation7 + $0xe0] sm:$0xff]
    %v210 = vld [vmem:[#allocation7 + $0xe8] sm:$0xff]
    %v211 = vld [vmem:[#allocation7 + $0xf0] sm:$0xff]
    %v212 = vld [vmem:[#allocation7 + $0xf8] sm:$0xff]
    %v213 = vld [vmem:[#allocation7 + $0x100] sm:$0xff]
    %v214 = vld [vmem:[#allocation7 + $0x108] sm:$0xff]
    %v215 = vld [vmem:[#allocation7 + $0x110] sm:$0xff]
    %v216 = vld [vmem:[#allocation7 + $0x118] sm:$0xff]
    %v217 = vld [vmem:[#allocation7 + $0x120] sm:$0xff]
    %v218 = vld [vmem:[#allocation7 + $0x128] sm:$0xff]
    %v219 = vld [vmem:[#allocation7 + $0x130] sm:$0xff]
    %v220 = vld [vmem:[#allocation7 + $0x138] sm:$0xff]
    %v221 = vld [vmem:[#allocation7 + $0x140] sm:$0xff]
    %v222 = vld [vmem:[#allocation7 + $0x148] sm:$0xff]
    %v223 = vld [vmem:[#allocation7 + $0x150] sm:$0xff]
    %v224 = vld [vmem:[#allocation7 + $0x158] sm:$0xff]
    %v225 = vld [vmem:[#allocation7 + $0x160] sm:$0xff]
    %v226 = vld [vmem:[#allocation7 + $0x168] sm:$0xff]
    %v227 = vld [vmem:[#allocation7 + $0x170] sm:$0xff]
    %v228 = vld [vmem:[#allocation7 + $0x178] sm:$0xff]
    %v229 = vld [vmem:[#allocation7 + $0x180] sm:$0xff]
    %v230 = vld [vmem:[#allocation7 + $0x188] sm:$0xff]
    %v231 = vld [vmem:[#allocation7 + $0x190] sm:$0xff]
    %v232 = vld [vmem:[#allocation7 + $0x198] sm:$0xff]
    %v233 = vld [vmem:[#allocation7 + $0x1a0] sm:$0xff]
    %v234 = vld [vmem:[#allocation7 + $0x1a8] sm:$0xff]
    %v235 = vld [vmem:[#allocation7 + $0x1b0] sm:$0xff]
    %v236 = vld [vmem:[#allocation7 + $0x1b8] sm:$0xff]
    %v237 = vld [vmem:[#allocation7 + $0x1c0] sm:$0xff]
    %v238 = vld [vmem:[#allocation7 + $0x1c8] sm:$0xff]
    %v239 = vld [vmem:[#allocation7 + $0x1d0] sm:$0xff]
    %v240 = vld [vmem:[#allocation7 + $0x1d8] sm:$0xff]
    %v241 = vld [vmem:[#allocation7 + $0x1e0] sm:$0xff]
    %v242 = vld [vmem:[#allocation7 + $0x1e8] sm:$0xff]
    %v243 = vld [vmem:[#allocation7 + $0x1f0] sm:$0xff]
    %v244 = vld [vmem:[#allocation7 + $0x1f8] sm:$0xff]
    %v245 = vld [vmem:[#allocation7 + $0x200] sm:$0xff]
    %v246 = vld [vmem:[#allocation7 + $0x208] sm:$0xff]
    %v247 = vld [vmem:[#allocation7 + $0x210] sm:$0xff]
    %v248 = vld [vmem:[#allocation7 + $0x218] sm:$0xff]
    %v249 = vld [vmem:[#allocation7 + $0x220] sm:$0xff]
    %v250 = vld [vmem:[#allocation7 + $0x228] sm:$0xff]
    %v251 = vld [vmem:[#allocation7 + $0x230] sm:$0xff]
    %v252 = vld [vmem:[#allocation7 + $0x238] sm:$0xff]
    %v253 = vld [vmem:[#allocation7 + $0x240] sm:$0xff]
    %v254 = vld [vmem:[#allocation7 + $0x248] sm:$0xff]
    %v255 = vld [vmem:[#allocation7 + $0x250] sm:$0xff]
    %v256 = vld [vmem:[#allocation7 + $0x258] sm:$0xff]
    %v257 = vld [vmem:[#allocation7 + $0x260] sm:$0xff]
    %v258 = vld [vmem:[#allocation7 + $0x268] sm:$0xff]
    %v259 = vld [vmem:[#allocation7 + $0x270] sm:$0xff]
    %v260 = vld [vmem:[#allocation7 + $0x278] sm:$0xff]
    %v261 = vld [vmem:[#allocation7 + $0x280] sm:$0xff]
    %v262 = vld [vmem:[#allocation7 + $0x288] sm:$0xff]
    %v263 = vld [vmem:[#allocation7 + $0x290] sm:$0xff]
    %v264 = vld [vmem:[#allocation7 + $0x298] sm:$0xff]
    %v265 = vld [vmem:[#allocation7 + $0x2a0] sm:$0xff]
    %v266 = vld [vmem:[#allocation7 + $0x2a8] sm:$0xff]
    %v267 = vld [vmem:[#allocation7 + $0x2b0] sm:$0xff]
    %v268 = vld [vmem:[#allocation7 + $0x2b8] sm:$0xff]
    %v269 = vld [vmem:[#allocation7 + $0x2c0] sm:$0xff]
    %v270 = vld [vmem:[#allocation7 + $0x2c8] sm:$0xff]
    %v271 = vld [vmem:[#allocation7 + $0x2d0] sm:$0xff]
    %v272 = vld [vmem:[#allocation7 + $0x2d8] sm:$0xff]
    %v273 = vld [vmem:[#allocation7 + $0x2e0] sm:$0xff]
    %v274 = vld [vmem:[#allocation7 + $0x2e8] sm:$0xff]
    %v275 = vld [vmem:[#allocation7 + $0x2f0] sm:$0xff]
    %v276 = vld [vmem:[#allocation7 + $0x2f8] sm:$0xff]
    %v277 = vld [vmem:[#allocation7 + $0x300] sm:$0xff]
    %v278 = vld [vmem:[#allocation7 + $0x308] sm:$0xff]
    %v279 = vld [vmem:[#allocation7 + $0x310] sm:$0xff]
    %v280 = vld [vmem:[#allocation7 + $0x318] sm:$0xff]
    %v281 = vld [vmem:[#allocation7 + $0x320] sm:$0xff]
    %v282 = vld [vmem:[#allocation7 + $0x328] sm:$0xff]
    %v283 = vld [vmem:[#allocation7 + $0x330] sm:$0xff]
    %v284 = vld [vmem:[#allocation7 + $0x338] sm:$0xff]
    %v285 = vld [vmem:[#allocation7 + $0x340] sm:$0xff]
    %v286 = vld [vmem:[#allocation7 + $0x348] sm:$0xff]
    %v287 = vld [vmem:[#allocation7 + $0x350] sm:$0xff]
    %v288 = vld [vmem:[#allocation7 + $0x358] sm:$0xff]
    %v289 = vld [vmem:[#allocation7 + $0x360] sm:$0xff]
    %v290 = vld [vmem:[#allocation7 + $0x368] sm:$0xff]
    %v291 = vld [vmem:[#allocation7 + $0x370] sm:$0xff]
    %v292 = vld [vmem:[#allocation7 + $0x378] sm:$0xff]
    %v293 = vld [vmem:[#allocation7 + $0x380] sm:$0xff]
    %v294 = vld [vmem:[#allocation7 + $0x388] sm:$0xff]
    %v295 = vld [vmem:[#allocation7 + $0x390] sm:$0xff]
    %v296 = vld [vmem:[#allocation7 + $0x398] sm:$0xff]
    %v297 = vld [vmem:[#allocation7 + $0x3a0] sm:$0xff]
    %v298 = vld [vmem:[#allocation7 + $0x3a8] sm:$0xff]
    %v299 = vld [vmem:[#allocation7 + $0x3b0] sm:$0xff]
    %v300 = vld [vmem:[#allocation7 + $0x3b8] sm:$0xff]
    %v301 = vld [vmem:[#allocation7 + $0x3c0] sm:$0xff]
    %v302 = vld [vmem:[#allocation7 + $0x3c8] sm:$0xff]
    %v303 = vld [vmem:[#allocation7 + $0x3d0] sm:$0xff]
    %v304 = vld [vmem:[#allocation7 + $0x3d8] sm:$0xff]
    %v305 = vld [vmem:[#allocation7 + $0x3e0] sm:$0xff]
    %v306 = vld [vmem:[#allocation7 + $0x3e8] sm:$0xff]
    %v307 = vld [vmem:[#allocation7 + $0x3f0] sm:$0xff]
    %v308 = vld [vmem:[#allocation7 + $0x3f8] sm:$0xff]
    %v309 = vld [vmem:[#allocation7 + $0x400] sm:$0xff]
    %v310 = vld [vmem:[#allocation7 + $0x408] sm:$0xff]
    %v311 = vld [vmem:[#allocation7 + $0x410] sm:$0xff]
    %v312 = vld [vmem:[#allocation7 + $0x418] sm:$0xff]
    %v313 = vld [vmem:[#allocation7 + $0x420] sm:$0xff]
    %v314 = vld [vmem:[#allocation7 + $0x428] sm:$0xff]
    %v315 = vld [vmem:[#allocation7 + $0x430] sm:$0xff]
    %v316 = vld [vmem:[#allocation7 + $0x438] sm:$0xff]
    %v317 = vld [vmem:[#allocation7 + $0x440] sm:$0xff]
    %v318 = vld [vmem:[#allocation7 + $0x448] sm:$0xff]
    %v319 = vld [vmem:[#allocation7 + $0x450] sm:$0xff]
    %v320 = vld [vmem:[#allocation7 + $0x458] sm:$0xff]
    %v321 = vld [vmem:[#allocation7 + $0x460] sm:$0xff]
    %v322 = vld [vmem:[#allocation7 + $0x468] sm:$0xff]
    %v323 = vld [vmem:[#allocation7 + $0x470] sm:$0xff]
    %v324 = vld [vmem:[#allocation7 + $0x478] sm:$0xff]
    %v325 = vld [vmem:[#allocation7 + $0x480] sm:$0xff]
    %v326 = vld [vmem:[#allocation7 + $0x488] sm:$0xff]
    %v327 = vld [vmem:[#allocation7 + $0x490] sm:$0xff]
    %v328 = vld [vmem:[#allocation7 + $0x498] sm:$0xff]
    %v329 = vld [vmem:[#allocation7 + $0x4a0] sm:$0xff]
    %v330 = vld [vmem:[#allocation7 + $0x4a8] sm:$0xff]
    %v331 = vld [vmem:[#allocation7 + $0x4b0] sm:$0xff]
    %v332 = vld [vmem:[#allocation7 + $0x4b8] sm:$0xff]
    %v333 = vld [vmem:[#allocation7 + $0x4c0] sm:$0xff]
    %v334 = vld [vmem:[#allocation7 + $0x4c8] sm:$0xff]
    %v335 = vld [vmem:[#allocation7 + $0x4d0] sm:$0xff]
    %v336 = vld [vmem:[#allocation7 + $0x4d8] sm:$0xff]
    %v337 = vld [vmem:[#allocation7 + $0x4e0] sm:$0xff]
    %v338 = vld [vmem:[#allocation7 + $0x4e8] sm:$0xff]
    %v339 = vld [vmem:[#allocation7 + $0x4f0] sm:$0xff]
    %v340 = vld [vmem:[#allocation7 + $0x4f8] sm:$0xff]
    %v341 = vld [vmem:[#allocation7 + $0x500] sm:$0xff]
    %v342 = vld [vmem:[#allocation7 + $0x508] sm:$0xff]
    %v343 = vld [vmem:[#allocation7 + $0x510] sm:$0xff]
    %v344 = vld [vmem:[#allocation7 + $0x518] sm:$0xff]
    %v345 = vld [vmem:[#allocation7 + $0x520] sm:$0xff]
    %v346 = vld [vmem:[#allocation7 + $0x528] sm:$0xff]
    %v347 = vld [vmem:[#allocation7 + $0x530] sm:$0xff]
    %v348 = vld [vmem:[#allocation7 + $0x538] sm:$0xff]
    %v349 = vld [vmem:[#allocation7 + $0x540] sm:$0xff]
    %v350 = vld [vmem:[#allocation7 + $0x548] sm:$0xff]
    %v351 = vld [vmem:[#allocation7 + $0x550] sm:$0xff]
    %v352 = vld [vmem:[#allocation7 + $0x558] sm:$0xff]
    %v353 = vld [vmem:[#allocation7 + $0x560] sm:$0xff]
    %v354 = vld [vmem:[#allocation7 + $0x568] sm:$0xff]
    %v355 = vld [vmem:[#allocation7 + $0x570] sm:$0xff]
    %v356 = vld [vmem:[#allocation7 + $0x578] sm:$0xff]
    %v357 = vld [vmem:[#allocation7 + $0x580] sm:$0xff]
    %v358 = vld [vmem:[#allocation7 + $0x588] sm:$0xff]
    %v359 = vld [vmem:[#allocation7 + $0x590] sm:$0xff]
    %v360 = vld [vmem:[#allocation7 + $0x598] sm:$0xff]
    %v361 = vld [vmem:[#allocation7 + $0x5a0] sm:$0xff]
    %v362 = vld [vmem:[#allocation7 + $0x5a8] sm:$0xff]
    %v363 = vld [vmem:[#allocation7 + $0x5b0] sm:$0xff]
    %v364 = vld [vmem:[#allocation7 + $0x5b8] sm:$0xff]
    %v365 = vld [vmem:[#allocation7 + $0x5c0] sm:$0xff]
    %v366 = vld [vmem:[#allocation7 + $0x5c8] sm:$0xff]
    %v367 = vld [vmem:[#allocation7 + $0x5d0] sm:$0xff]
    %v368 = vld [vmem:[#allocation7 + $0x5d8] sm:$0xff]
    %v369 = vld [vmem:[#allocation7 + $0x5e0] sm:$0xff]
    %v370 = vld [vmem:[#allocation7 + $0x5e8] sm:$0xff]
    %v371 = vld [vmem:[#allocation7 + $0x5f0] sm:$0xff]
    %v372 = vld [vmem:[#allocation7 + $0x5f8] sm:$0xff]
    %v373 = vld [vmem:[#allocation7 + $0x600] sm:$0xff]
    %v374 = vld [vmem:[#allocation7 + $0x608] sm:$0xff]
    %v375 = vld [vmem:[#allocation7 + $0x610] sm:$0xff]
    %v376 = vld [vmem:[#allocation7 + $0x618] sm:$0xff]
    %v377 = vld [vmem:[#allocation7 + $0x620] sm:$0xff]
    %v378 = vld [vmem:[#allocation7 + $0x628] sm:$0xff]
    %v379 = vld [vmem:[#allocation7 + $0x630] sm:$0xff]
    %v380 = vld [vmem:[#allocation7 + $0x638] sm:$0xff]
    %v381 = vld [vmem:[#allocation7 + $0x640] sm:$0xff]
    %v382 = vld [vmem:[#allocation7 + $0x648] sm:$0xff]
    %v383 = vld [vmem:[#allocation7 + $0x650] sm:$0xff]
    %v384 = vld [vmem:[#allocation7 + $0x658] sm:$0xff]
    %v385 = vld [vmem:[#allocation7 + $0x660] sm:$0xff]
    %v386 = vld [vmem:[#allocation7 + $0x668] sm:$0xff]
    %v387 = vld [vmem:[#allocation7 + $0x670] sm:$0xff]
    %v388 = vld [vmem:[#allocation7 + $0x678] sm:$0xff]
    %v389 = vld [vmem:[#allocation7 + $0x680] sm:$0xff]
    %v390 = vld [vmem:[#allocation7 + $0x688] sm:$0xff]
    %v391 = vld [vmem:[#allocation7 + $0x690] sm:$0xff]
    %v392 = vld [vmem:[#allocation7 + $0x698] sm:$0xff]
    %v393 = vld [vmem:[#allocation7 + $0x6a0] sm:$0xff]
    %v394 = vld [vmem:[#allocation7 + $0x6a8] sm:$0xff]
    %v395 = vld [vmem:[#allocation7 + $0x6b0] sm:$0xff]
    %v396 = vld [vmem:[#allocation7 + $0x6b8] sm:$0xff]
    %v397 = vld [vmem:[#allocation7 + $0x6c0] sm:$0xff]
    %v398 = vld [vmem:[#allocation7 + $0x6c8] sm:$0xff]
    %v399 = vld [vmem:[#allocation7 + $0x6d0] sm:$0xff]
    %v400 = vld [vmem:[#allocation7 + $0x6d8] sm:$0xff]
    %v401 = vld [vmem:[#allocation7 + $0x6e0] sm:$0xff]
    %v402 = vld [vmem:[#allocation7 + $0x6e8] sm:$0xff]
    %v403 = vld [vmem:[#allocation7 + $0x6f0] sm:$0xff]
    %v404 = vld [vmem:[#allocation7 + $0x6f8] sm:$0xff]
    %v405 = vld [vmem:[#allocation7 + $0x700] sm:$0xff]
    %v406 = vld [vmem:[#allocation7 + $0x708] sm:$0xff]
    %v407 = vld [vmem:[#allocation7 + $0x710] sm:$0xff]
    %v408 = vld [vmem:[#allocation7 + $0x718] sm:$0xff]
    %v409 = vld [vmem:[#allocation7 + $0x720] sm:$0xff]
    %v410 = vld [vmem:[#allocation7 + $0x728] sm:$0xff]
    %v411 = vld [vmem:[#allocation7 + $0x730] sm:$0xff]
    %v412 = vld [vmem:[#allocation7 + $0x738] sm:$0xff]
    %v413 = vld [vmem:[#allocation7 + $0x740] sm:$0xff]
    %v414 = vld [vmem:[#allocation7 + $0x748] sm:$0xff]
    %v415 = vld [vmem:[#allocation7 + $0x750] sm:$0xff]
    %v416 = vld [vmem:[#allocation7 + $0x758] sm:$0xff]
    %v417 = vld [vmem:[#allocation7 + $0x760] sm:$0xff]
    %v418 = vld [vmem:[#allocation7 + $0x768] sm:$0xff]
    %v419 = vld [vmem:[#allocation7 + $0x770] sm:$0xff]
    %v420 = vld [vmem:[#allocation7 + $0x778] sm:$0xff]
    %v421 = vld [vmem:[#allocation7 + $0x780] sm:$0xff]
    %v422 = vld [vmem:[#allocation7 + $0x788] sm:$0xff]
    %v423 = vld [vmem:[#allocation7 + $0x790] sm:$0xff]
    %v424 = vld [vmem:[#allocation7 + $0x798] sm:$0xff]
    %v425 = vld [vmem:[#allocation7 + $0x7a0] sm:$0xff]
    %v426 = vld [vmem:[#allocation7 + $0x7a8] sm:$0xff]
    %v427 = vld [vmem:[#allocation7 + $0x7b0] sm:$0xff]
    %v428 = vld [vmem:[#allocation7 + $0x7b8] sm:$0xff]
    %v429 = vld [vmem:[#allocation7 + $0x7c0] sm:$0xff]
    %v430 = vld [vmem:[#allocation7 + $0x7c8] sm:$0xff]
    %v431 = vld [vmem:[#allocation7 + $0x7d0] sm:$0xff]
    %v432 = vld [vmem:[#allocation7 + $0x7d8] sm:$0xff]
    %v433 = vld [vmem:[#allocation7 + $0x7e0] sm:$0xff]
    %v434 = vld [vmem:[#allocation7 + $0x7e8] sm:$0xff]
    %v435 = vld [vmem:[#allocation7 + $0x7f0] sm:$0xff]
    %v436 = vld [vmem:[#allocation7 + $0x7f8] sm:$0xff]
    %v437 = vld [vmem:[#allocation7 + $0x800] sm:$0xff]
    %v438 = vld [vmem:[#allocation7 + $0x808] sm:$0xff]
    %v439 = vld [vmem:[#allocation7 + $0x810] sm:$0xff]
    %v440 = vld [vmem:[#allocation7 + $0x818] sm:$0xff]
    %v441 = vld [vmem:[#allocation7 + $0x820] sm:$0xff]
    %v442 = vld [vmem:[#allocation7 + $0x828] sm:$0xff]
    %v443 = vld [vmem:[#allocation7 + $0x830] sm:$0xff]
    %v444 = vld [vmem:[#allocation7 + $0x838] sm:$0xff]
    %v445 = vld [vmem:[#allocation7 + $0x840] sm:$0xff]
    %v446 = vld [vmem:[#allocation7 + $0x848] sm:$0xff]
    %v447 = vld [vmem:[#allocation7 + $0x850] sm:$0xff]
    %v448 = vld [vmem:[#allocation7 + $0x858] sm:$0xff]
    %v449 = vld [vmem:[#allocation7 + $0x860] sm:$0xff]
    %v450 = vld [vmem:[#allocation7 + $0x868] sm:$0xff]
    %v451 = vld [vmem:[#allocation7 + $0x870] sm:$0xff]
    %v452 = vld [vmem:[#allocation7 + $0x878] sm:$0xff]
    %v453 = vld [vmem:[#allocation7 + $0x880] sm:$0xff]
    %v454 = vld [vmem:[#allocation7 + $0x888] sm:$0xff]
    %v455 = vld [vmem:[#allocation7 + $0x890] sm:$0xff]
    %v456 = vld [vmem:[#allocation7 + $0x898] sm:$0xff]
    %v457 = vld [vmem:[#allocation7 + $0x8a0] sm:$0xff]
    %v458 = vld [vmem:[#allocation7 + $0x8a8] sm:$0xff]
    %v459 = vld [vmem:[#allocation7 + $0x8b0] sm:$0xff]
    %v460 = vld [vmem:[#allocation7 + $0x8b8] sm:$0xff]
    %v461 = vld [vmem:[#allocation7 + $0x8c0] sm:$0xff]
    %v462 = vld [vmem:[#allocation7 + $0x8c8] sm:$0xff]
    %v463 = vld [vmem:[#allocation7 + $0x8d0] sm:$0xff]
    %v464 = vld [vmem:[#allocation7 + $0x8d8] sm:$0xff]
    %v465 = vld [vmem:[#allocation7 + $0x8e0] sm:$0xff]
    %v466 = vld [vmem:[#allocation7 + $0x8e8] sm:$0xff]
    %v467 = vld [vmem:[#allocation7 + $0x8f0] sm:$0xff]
    %v468 = vld [vmem:[#allocation7 + $0x8f8] sm:$0xff]
    %v757 = vunpack.c.l.b16 %v181
    %v758 = vunpack.c.h.b16 %v181
    %v759 = vunpack.c.l.b16 %v182
    %v760 = vunpack.c.h.b16 %v182
    %v761 = vunpack.c.l.b16 %v183
    %v762 = vunpack.c.h.b16 %v183
    %v763 = vunpack.c.l.b16 %v184
    %v764 = vunpack.c.h.b16 %v184
    %v765 = vunpack.c.l.b16 %v185
    %v766 = vunpack.c.h.b16 %v185
    %v767 = vunpack.c.l.b16 %v186
    %v768 = vunpack.c.h.b16 %v186
    %v769 = vunpack.c.l.b16 %v187
    %v770 = vunpack.c.h.b16 %v187
    %v771 = vunpack.c.l.b16 %v188
    %v772 = vunpack.c.h.b16 %v188
    %v773 = vunpack.c.l.b16 %v189
    %v774 = vunpack.c.h.b16 %v189
    %v775 = vunpack.c.l.b16 %v190
    %v776 = vunpack.c.h.b16 %v190
    %v777 = vunpack.c.l.b16 %v191
    %v778 = vunpack.c.h.b16 %v191
    %v779 = vunpack.c.l.b16 %v192
    %v780 = vunpack.c.h.b16 %v192
    %v781 = vunpack.c.l.b16 %v193
    %v782 = vunpack.c.h.b16 %v193
    %v783 = vunpack.c.l.b16 %v194
    %v784 = vunpack.c.h.b16 %v194
    %v785 = vunpack.c.l.b16 %v195
    %v786 = vunpack.c.h.b16 %v195
    %v787 = vunpack.c.l.b16 %v196
    %v788 = vunpack.c.h.b16 %v196
    %v789 = vunpack.c.l.b16 %v197
    %v790 = vunpack.c.h.b16 %v197
    %v791 = vunpack.c.l.b16 %v198
    %v792 = vunpack.c.h.b16 %v198
    %v793 = vunpack.c.l.b16 %v199
    %v794 = vunpack.c.h.b16 %v199
    %v795 = vunpack.c.l.b16 %v200
    %v796 = vunpack.c.h.b16 %v200
    %v797 = vunpack.c.l.b16 %v201
    %v798 = vunpack.c.h.b16 %v201
    %v799 = vunpack.c.l.b16 %v202
    %v800 = vunpack.c.h.b16 %v202
    %v801 = vunpack.c.l.b16 %v203
    %v802 = vunpack.c.h.b16 %v203
    %v803 = vunpack.c.l.b16 %v204
    %v804 = vunpack.c.h.b16 %v204
    %v805 = vunpack.c.l.b16 %v205
    %v806 = vunpack.c.h.b16 %v205
    %v807 = vunpack.c.l.b16 %v206
    %v808 = vunpack.c.h.b16 %v206
    %v809 = vunpack.c.l.b16 %v207
    %v810 = vunpack.c.h.b16 %v207
    %v811 = vunpack.c.l.b16 %v208
    %v812 = vunpack.c.h.b16 %v208
    %v813 = vunpack.c.l.b16 %v209
    %v814 = vunpack.c.h.b16 %v209
    %v815 = vunpack.c.l.b16 %v210
    %v816 = vunpack.c.h.b16 %v210
    %v817 = vunpack.c.l.b16 %v211
    %v818 = vunpack.c.h.b16 %v211
    %v819 = vunpack.c.l.b16 %v212
    %v820 = vunpack.c.h.b16 %v212
    %v821 = vunpack.c.l.b16 %v213
    %v822 = vunpack.c.h.b16 %v213
    %v823 = vunpack.c.l.b16 %v214
    %v824 = vunpack.c.h.b16 %v214
    %v825 = vunpack.c.l.b16 %v215
    %v826 = vunpack.c.h.b16 %v215
    %v827 = vunpack.c.l.b16 %v216
    %v828 = vunpack.c.h.b16 %v216
    %v829 = vunpack.c.l.b16 %v217
    %v830 = vunpack.c.h.b16 %v217
    %v831 = vunpack.c.l.b16 %v218
    %v832 = vunpack.c.h.b16 %v218
    %v833 = vunpack.c.l.b16 %v219
    %v834 = vunpack.c.h.b16 %v219
    %v835 = vunpack.c.l.b16 %v220
    %v836 = vunpack.c.h.b16 %v220
    %v837 = vunpack.c.l.b16 %v221
    %v838 = vunpack.c.h.b16 %v221
    %v839 = vunpack.c.l.b16 %v222
    %v840 = vunpack.c.h.b16 %v222
    %v841 = vunpack.c.l.b16 %v223
    %v842 = vunpack.c.h.b16 %v223
    %v843 = vunpack.c.l.b16 %v224
    %v844 = vunpack.c.h.b16 %v224
    %v845 = vunpack.c.l.b16 %v225
    %v846 = vunpack.c.h.b16 %v225
    %v847 = vunpack.c.l.b16 %v226
    %v848 = vunpack.c.h.b16 %v226
    %v849 = vunpack.c.l.b16 %v227
    %v850 = vunpack.c.h.b16 %v227
    %v851 = vunpack.c.l.b16 %v228
    %v852 = vunpack.c.h.b16 %v228
    %v853 = vunpack.c.l.b16 %v229
    %v854 = vunpack.c.h.b16 %v229
    %v855 = vunpack.c.l.b16 %v230
    %v856 = vunpack.c.h.b16 %v230
    %v857 = vunpack.c.l.b16 %v231
    %v858 = vunpack.c.h.b16 %v231
    %v859 = vunpack.c.l.b16 %v232
    %v860 = vunpack.c.h.b16 %v232
    %v861 = vunpack.c.l.b16 %v233
    %v862 = vunpack.c.h.b16 %v233
    %v863 = vunpack.c.l.b16 %v234
    %v864 = vunpack.c.h.b16 %v234
    %v865 = vunpack.c.l.b16 %v235
    %v866 = vunpack.c.h.b16 %v235
    %v867 = vunpack.c.l.b16 %v236
    %v868 = vunpack.c.h.b16 %v236
    %v869 = vunpack.c.l.b16 %v237
    %v870 = vunpack.c.h.b16 %v237
    %v871 = vunpack.c.l.b16 %v238
    %v872 = vunpack.c.h.b16 %v238
    %v873 = vunpack.c.l.b16 %v239
    %v874 = vunpack.c.h.b16 %v239
    %v875 = vunpack.c.l.b16 %v240
    %v876 = vunpack.c.h.b16 %v240
    %v877 = vunpack.c.l.b16 %v241
    %v878 = vunpack.c.h.b16 %v241
    %v879 = vunpack.c.l.b16 %v242
    %v880 = vunpack.c.h.b16 %v242
    %v881 = vunpack.c.l.b16 %v243
    %v882 = vunpack.c.h.b16 %v243
    %v883 = vunpack.c.l.b16 %v244
    %v884 = vunpack.c.h.b16 %v244
    %v885 = vunpack.c.l.b16 %v245
    %v886 = vunpack.c.h.b16 %v245
    %v887 = vunpack.c.l.b16 %v246
    %v888 = vunpack.c.h.b16 %v246
    %v889 = vunpack.c.l.b16 %v247
    %v890 = vunpack.c.h.b16 %v247
    %v891 = vunpack.c.l.b16 %v248
    %v892 = vunpack.c.h.b16 %v248
    %v893 = vunpack.c.l.b16 %v249
    %v894 = vunpack.c.h.b16 %v249
    %v895 = vunpack.c.l.b16 %v250
    %v896 = vunpack.c.h.b16 %v250
    %v897 = vunpack.c.l.b16 %v251
    %v898 = vunpack.c.h.b16 %v251
    %v899 = vunpack.c.l.b16 %v252
    %v900 = vunpack.c.h.b16 %v252
    %v901 = vunpack.c.l.b16 %v253
    %v902 = vunpack.c.h.b16 %v253
    %v903 = vunpack.c.l.b16 %v254
    %v904 = vunpack.c.h.b16 %v254
    %v905 = vunpack.c.l.b16 %v255
    %v906 = vunpack.c.h.b16 %v255
    %v907 = vunpack.c.l.b16 %v256
    %v908 = vunpack.c.h.b16 %v256
    %v909 = vunpack.c.l.b16 %v257
    %v910 = vunpack.c.h.b16 %v257
    %v911 = vunpack.c.l.b16 %v258
    %v912 = vunpack.c.h.b16 %v258
    %v913 = vunpack.c.l.b16 %v259
    %v914 = vunpack.c.h.b16 %v259
    %v915 = vunpack.c.l.b16 %v260
    %v916 = vunpack.c.h.b16 %v260
    %v917 = vunpack.c.l.b16 %v261
    %v918 = vunpack.c.h.b16 %v261
    %v919 = vunpack.c.l.b16 %v262
    %v920 = vunpack.c.h.b16 %v262
    %v921 = vunpack.c.l.b16 %v263
    %v922 = vunpack.c.h.b16 %v263
    %v923 = vunpack.c.l.b16 %v264
    %v924 = vunpack.c.h.b16 %v264
    %v925 = vunpack.c.l.b16 %v265
    %v926 = vunpack.c.h.b16 %v265
    %v927 = vunpack.c.l.b16 %v266
    %v928 = vunpack.c.h.b16 %v266
    %v929 = vunpack.c.l.b16 %v267
    %v930 = vunpack.c.h.b16 %v267
    %v931 = vunpack.c.l.b16 %v268
    %v932 = vunpack.c.h.b16 %v268
    %v933 = vunpack.c.l.b16 %v269
    %v934 = vunpack.c.h.b16 %v269
    %v935 = vunpack.c.l.b16 %v270
    %v936 = vunpack.c.h.b16 %v270
    %v937 = vunpack.c.l.b16 %v271
    %v938 = vunpack.c.h.b16 %v271
    %v939 = vunpack.c.l.b16 %v272
    %v940 = vunpack.c.h.b16 %v272
    %v941 = vunpack.c.l.b16 %v273
    %v942 = vunpack.c.h.b16 %v273
    %v943 = vunpack.c.l.b16 %v274
    %v944 = vunpack.c.h.b16 %v274
    %v945 = vunpack.c.l.b16 %v275
    %v946 = vunpack.c.h.b16 %v275
    %v947 = vunpack.c.l.b16 %v276
    %v948 = vunpack.c.h.b16 %v276
    %v949 = vunpack.c.l.b16 %v277
    %v950 = vunpack.c.h.b16 %v277
    %v951 = vunpack.c.l.b16 %v278
    %v952 = vunpack.c.h.b16 %v278
    %v953 = vunpack.c.l.b16 %v279
    %v954 = vunpack.c.h.b16 %v279
    %v955 = vunpack.c.l.b16 %v280
    %v956 = vunpack.c.h.b16 %v280
    %v957 = vunpack.c.l.b16 %v281
    %v958 = vunpack.c.h.b16 %v281
    %v959 = vunpack.c.l.b16 %v282
    %v960 = vunpack.c.h.b16 %v282
    %v961 = vunpack.c.l.b16 %v283
    %v962 = vunpack.c.h.b16 %v283
    %v963 = vunpack.c.l.b16 %v284
    %v964 = vunpack.c.h.b16 %v284
    %v965 = vunpack.c.l.b16 %v285
    %v966 = vunpack.c.h.b16 %v285
    %v967 = vunpack.c.l.b16 %v286
    %v968 = vunpack.c.h.b16 %v286
    %v969 = vunpack.c.l.b16 %v287
    %v970 = vunpack.c.h.b16 %v287
    %v971 = vunpack.c.l.b16 %v288
    %v972 = vunpack.c.h.b16 %v288
    %v973 = vunpack.c.l.b16 %v289
    %v974 = vunpack.c.h.b16 %v289
    %v975 = vunpack.c.l.b16 %v290
    %v976 = vunpack.c.h.b16 %v290
    %v977 = vunpack.c.l.b16 %v291
    %v978 = vunpack.c.h.b16 %v291
    %v979 = vunpack.c.l.b16 %v292
    %v980 = vunpack.c.h.b16 %v292
    %v981 = vunpack.c.l.b16 %v293
    %v982 = vunpack.c.h.b16 %v293
    %v983 = vunpack.c.l.b16 %v294
    %v984 = vunpack.c.h.b16 %v294
    %v985 = vunpack.c.l.b16 %v295
    %v986 = vunpack.c.h.b16 %v295
    %v987 = vunpack.c.l.b16 %v296
    %v988 = vunpack.c.h.b16 %v296
    %v989 = vunpack.c.l.b16 %v297
    %v990 = vunpack.c.h.b16 %v297
    %v991 = vunpack.c.l.b16 %v298
    %v992 = vunpack.c.h.b16 %v298
    %v993 = vunpack.c.l.b16 %v299
    %v994 = vunpack.c.h.b16 %v299
    %v995 = vunpack.c.l.b16 %v300
    %v996 = vunpack.c.h.b16 %v300
    %v997 = vunpack.c.l.b16 %v301
    %v998 = vunpack.c.h.b16 %v301
    %v999 = vunpack.c.l.b16 %v302
    %v1000 = vunpack.c.h.b16 %v302
    %v1001 = vunpack.c.l.b16 %v303
    %v1002 = vunpack.c.h.b16 %v303
    %v1003 = vunpack.c.l.b16 %v304
    %v1004 = vunpack.c.h.b16 %v304
    %v1005 = vunpack.c.l.b16 %v305
    %v1006 = vunpack.c.h.b16 %v305
    %v1007 = vunpack.c.l.b16 %v306
    %v1008 = vunpack.c.h.b16 %v306
    %v1009 = vunpack.c.l.b16 %v307
    %v1010 = vunpack.c.h.b16 %v307
    %v1011 = vunpack.c.l.b16 %v308
    %v1012 = vunpack.c.h.b16 %v308
    %v1013 = vunpack.c.l.b16 %v309
    %v1014 = vunpack.c.h.b16 %v309
    %v1015 = vunpack.c.l.b16 %v310
    %v1016 = vunpack.c.h.b16 %v310
    %v1017 = vunpack.c.l.b16 %v311
    %v1018 = vunpack.c.h.b16 %v311
    %v1019 = vunpack.c.l.b16 %v312
    %v1020 = vunpack.c.h.b16 %v312
    %v1021 = vunpack.c.l.b16 %v313
    %v1022 = vunpack.c.h.b16 %v313
    %v1023 = vunpack.c.l.b16 %v314
    %v1024 = vunpack.c.h.b16 %v314
    %v1025 = vunpack.c.l.b16 %v315
    %v1026 = vunpack.c.h.b16 %v315
    %v1027 = vunpack.c.l.b16 %v316
    %v1028 = vunpack.c.h.b16 %v316
    %v1029 = vunpack.c.l.b16 %v317
    %v1030 = vunpack.c.h.b16 %v317
    %v1031 = vunpack.c.l.b16 %v318
    %v1032 = vunpack.c.h.b16 %v318
    %v1033 = vunpack.c.l.b16 %v319
    %v1034 = vunpack.c.h.b16 %v319
    %v1035 = vunpack.c.l.b16 %v320
    %v1036 = vunpack.c.h.b16 %v320
    %v1037 = vunpack.c.l.b16 %v321
    %v1038 = vunpack.c.h.b16 %v321
    %v1039 = vunpack.c.l.b16 %v322
    %v1040 = vunpack.c.h.b16 %v322
    %v1041 = vunpack.c.l.b16 %v323
    %v1042 = vunpack.c.h.b16 %v323
    %v1043 = vunpack.c.l.b16 %v324
    %v1044 = vunpack.c.h.b16 %v324
    %v1045 = vunpack.c.l.b16 %v325
    %v1046 = vunpack.c.h.b16 %v325
    %v1047 = vunpack.c.l.b16 %v326
    %v1048 = vunpack.c.h.b16 %v326
    %v1049 = vunpack.c.l.b16 %v327
    %v1050 = vunpack.c.h.b16 %v327
    %v1051 = vunpack.c.l.b16 %v328
    %v1052 = vunpack.c.h.b16 %v328
    %v1053 = vunpack.c.l.b16 %v329
    %v1054 = vunpack.c.h.b16 %v329
    %v1055 = vunpack.c.l.b16 %v330
    %v1056 = vunpack.c.h.b16 %v330
    %v1057 = vunpack.c.l.b16 %v331
    %v1058 = vunpack.c.h.b16 %v331
    %v1059 = vunpack.c.l.b16 %v332
    %v1060 = vunpack.c.h.b16 %v332
    %v1061 = vunpack.c.l.b16 %v333
    %v1062 = vunpack.c.h.b16 %v333
    %v1063 = vunpack.c.l.b16 %v334
    %v1064 = vunpack.c.h.b16 %v334
    %v1065 = vunpack.c.l.b16 %v335
    %v1066 = vunpack.c.h.b16 %v335
    %v1067 = vunpack.c.l.b16 %v336
    %v1068 = vunpack.c.h.b16 %v336
    %v1069 = vunpack.c.l.b16 %v337
    %v1070 = vunpack.c.h.b16 %v337
    %v1071 = vunpack.c.l.b16 %v338
    %v1072 = vunpack.c.h.b16 %v338
    %v1073 = vunpack.c.l.b16 %v339
    %v1074 = vunpack.c.h.b16 %v339
    %v1075 = vunpack.c.l.b16 %v340
    %v1076 = vunpack.c.h.b16 %v340
    %v1077 = vunpack.c.l.b16 %v341
    %v1078 = vunpack.c.h.b16 %v341
    %v1079 = vunpack.c.l.b16 %v342
    %v1080 = vunpack.c.h.b16 %v342
    %v1081 = vunpack.c.l.b16 %v343
    %v1082 = vunpack.c.h.b16 %v343
    %v1083 = vunpack.c.l.b16 %v344
    %v1084 = vunpack.c.h.b16 %v344
    %v1085 = vunpack.c.l.b16 %v345
    %v1086 = vunpack.c.h.b16 %v345
    %v1087 = vunpack.c.l.b16 %v346
    %v1088 = vunpack.c.h.b16 %v346
    %v1089 = vunpack.c.l.b16 %v347
    %v1090 = vunpack.c.h.b16 %v347
    %v1091 = vunpack.c.l.b16 %v348
    %v1092 = vunpack.c.h.b16 %v348
    %v1093 = vunpack.c.l.b16 %v349
    %v1094 = vunpack.c.h.b16 %v349
    %v1095 = vunpack.c.l.b16 %v350
    %v1096 = vunpack.c.h.b16 %v350
    %v1097 = vunpack.c.l.b16 %v351
    %v1098 = vunpack.c.h.b16 %v351
    %v1099 = vunpack.c.l.b16 %v352
    %v1100 = vunpack.c.h.b16 %v352
    %v1101 = vunpack.c.l.b16 %v353
    %v1102 = vunpack.c.h.b16 %v353
    %v1103 = vunpack.c.l.b16 %v354
    %v1104 = vunpack.c.h.b16 %v354
    %v1105 = vunpack.c.l.b16 %v355
    %v1106 = vunpack.c.h.b16 %v355
    %v1107 = vunpack.c.l.b16 %v356
    %v1108 = vunpack.c.h.b16 %v356
    %v1109 = vunpack.c.l.b16 %v357
    %v1110 = vunpack.c.h.b16 %v357
    %v1111 = vunpack.c.l.b16 %v358
    %v1112 = vunpack.c.h.b16 %v358
    %v1113 = vunpack.c.l.b16 %v359
    %v1114 = vunpack.c.h.b16 %v359
    %v1115 = vunpack.c.l.b16 %v360
    %v1116 = vunpack.c.h.b16 %v360
    %v1117 = vunpack.c.l.b16 %v361
    %v1118 = vunpack.c.h.b16 %v361
    %v1119 = vunpack.c.l.b16 %v362
    %v1120 = vunpack.c.h.b16 %v362
    %v1121 = vunpack.c.l.b16 %v363
    %v1122 = vunpack.c.h.b16 %v363
    %v1123 = vunpack.c.l.b16 %v364
    %v1124 = vunpack.c.h.b16 %v364
    %v1125 = vunpack.c.l.b16 %v365
    %v1126 = vunpack.c.h.b16 %v365
    %v1127 = vunpack.c.l.b16 %v366
    %v1128 = vunpack.c.h.b16 %v366
    %v1129 = vunpack.c.l.b16 %v367
    %v1130 = vunpack.c.h.b16 %v367
    %v1131 = vunpack.c.l.b16 %v368
    %v1132 = vunpack.c.h.b16 %v368
    %v1133 = vunpack.c.l.b16 %v369
    %v1134 = vunpack.c.h.b16 %v369
    %v1135 = vunpack.c.l.b16 %v370
    %v1136 = vunpack.c.h.b16 %v370
    %v1137 = vunpack.c.l.b16 %v371
    %v1138 = vunpack.c.h.b16 %v371
    %v1139 = vunpack.c.l.b16 %v372
    %v1140 = vunpack.c.h.b16 %v372
    %v1141 = vunpack.c.l.b16 %v373
    %v1142 = vunpack.c.h.b16 %v373
    %v1143 = vunpack.c.l.b16 %v374
    %v1144 = vunpack.c.h.b16 %v374
    %v1145 = vunpack.c.l.b16 %v375
    %v1146 = vunpack.c.h.b16 %v375
    %v1147 = vunpack.c.l.b16 %v376
    %v1148 = vunpack.c.h.b16 %v376
    %v1149 = vunpack.c.l.b16 %v377
    %v1150 = vunpack.c.h.b16 %v377
    %v1151 = vunpack.c.l.b16 %v378
    %v1152 = vunpack.c.h.b16 %v378
    %v1153 = vunpack.c.l.b16 %v379
    %v1154 = vunpack.c.h.b16 %v379
    %v1155 = vunpack.c.l.b16 %v380
    %v1156 = vunpack.c.h.b16 %v380
    %v1157 = vunpack.c.l.b16 %v381
    %v1158 = vunpack.c.h.b16 %v381
    %v1159 = vunpack.c.l.b16 %v382
    %v1160 = vunpack.c.h.b16 %v382
    %v1161 = vunpack.c.l.b16 %v383
    %v1162 = vunpack.c.h.b16 %v383
    %v1163 = vunpack.c.l.b16 %v384
    %v1164 = vunpack.c.h.b16 %v384
    %v1165 = vunpack.c.l.b16 %v385
    %v1166 = vunpack.c.h.b16 %v385
    %v1167 = vunpack.c.l.b16 %v386
    %v1168 = vunpack.c.h.b16 %v386
    %v1169 = vunpack.c.l.b16 %v387
    %v1170 = vunpack.c.h.b16 %v387
    %v1171 = vunpack.c.l.b16 %v388
    %v1172 = vunpack.c.h.b16 %v388
    %v1173 = vunpack.c.l.b16 %v389
    %v1174 = vunpack.c.h.b16 %v389
    %v1175 = vunpack.c.l.b16 %v390
    %v1176 = vunpack.c.h.b16 %v390
    %v1177 = vunpack.c.l.b16 %v391
    %v1178 = vunpack.c.h.b16 %v391
    %v1179 = vunpack.c.l.b16 %v392
    %v1180 = vunpack.c.h.b16 %v392
    %v1181 = vunpack.c.l.b16 %v393
    %v1182 = vunpack.c.h.b16 %v393
    %v1183 = vunpack.c.l.b16 %v394
    %v1184 = vunpack.c.h.b16 %v394
    %v1185 = vunpack.c.l.b16 %v395
    %v1186 = vunpack.c.h.b16 %v395
    %v1187 = vunpack.c.l.b16 %v396
    %v1188 = vunpack.c.h.b16 %v396
    %v1189 = vunpack.c.l.b16 %v397
    %v1190 = vunpack.c.h.b16 %v397
    %v1191 = vunpack.c.l.b16 %v398
    %v1192 = vunpack.c.h.b16 %v398
    %v1193 = vunpack.c.l.b16 %v399
    %v1194 = vunpack.c.h.b16 %v399
    %v1195 = vunpack.c.l.b16 %v400
    %v1196 = vunpack.c.h.b16 %v400
    %v1197 = vunpack.c.l.b16 %v401
    %v1198 = vunpack.c.h.b16 %v401
    %v1199 = vunpack.c.l.b16 %v402
    %v1200 = vunpack.c.h.b16 %v402
    %v1201 = vunpack.c.l.b16 %v403
    %v1202 = vunpack.c.h.b16 %v403
    %v1203 = vunpack.c.l.b16 %v404
    %v1204 = vunpack.c.h.b16 %v404
    %v1205 = vunpack.c.l.b16 %v405
    %v1206 = vunpack.c.h.b16 %v405
    %v1207 = vunpack.c.l.b16 %v406
    %v1208 = vunpack.c.h.b16 %v406
    %v1209 = vunpack.c.l.b16 %v407
    %v1210 = vunpack.c.h.b16 %v407
    %v1211 = vunpack.c.l.b16 %v408
    %v1212 = vunpack.c.h.b16 %v408
    %v1213 = vunpack.c.l.b16 %v409
    %v1214 = vunpack.c.h.b16 %v409
    %v1215 = vunpack.c.l.b16 %v410
    %v1216 = vunpack.c.h.b16 %v410
    %v1217 = vunpack.c.l.b16 %v411
    %v1218 = vunpack.c.h.b16 %v411
    %v1219 = vunpack.c.l.b16 %v412
    %v1220 = vunpack.c.h.b16 %v412
    %v1221 = vunpack.c.l.b16 %v413
    %v1222 = vunpack.c.h.b16 %v413
    %v1223 = vunpack.c.l.b16 %v414
    %v1224 = vunpack.c.h.b16 %v414
    %v1225 = vunpack.c.l.b16 %v415
    %v1226 = vunpack.c.h.b16 %v415
    %v1227 = vunpack.c.l.b16 %v416
    %v1228 = vunpack.c.h.b16 %v416
    %v1229 = vunpack.c.l.b16 %v417
    %v1230 = vunpack.c.h.b16 %v417
    %v1231 = vunpack.c.l.b16 %v418
    %v1232 = vunpack.c.h.b16 %v418
    %v1233 = vunpack.c.l.b16 %v419
    %v1234 = vunpack.c.h.b16 %v419
    %v1235 = vunpack.c.l.b16 %v420
    %v1236 = vunpack.c.h.b16 %v420
    %v1237 = vunpack.c.l.b16 %v421
    %v1238 = vunpack.c.h.b16 %v421
    %v1239 = vunpack.c.l.b16 %v422
    %v1240 = vunpack.c.h.b16 %v422
    %v1241 = vunpack.c.l.b16 %v423
    %v1242 = vunpack.c.h.b16 %v423
    %v1243 = vunpack.c.l.b16 %v424
    %v1244 = vunpack.c.h.b16 %v424
    %v1245 = vunpack.c.l.b16 %v425
    %v1246 = vunpack.c.h.b16 %v425
    %v1247 = vunpack.c.l.b16 %v426
    %v1248 = vunpack.c.h.b16 %v426
    %v1249 = vunpack.c.l.b16 %v427
    %v1250 = vunpack.c.h.b16 %v427
    %v1251 = vunpack.c.l.b16 %v428
    %v1252 = vunpack.c.h.b16 %v428
    %v1253 = vunpack.c.l.b16 %v429
    %v1254 = vunpack.c.h.b16 %v429
    %v1255 = vunpack.c.l.b16 %v430
    %v1256 = vunpack.c.h.b16 %v430
    %v1257 = vunpack.c.l.b16 %v431
    %v1258 = vunpack.c.h.b16 %v431
    %v1259 = vunpack.c.l.b16 %v432
    %v1260 = vunpack.c.h.b16 %v432
    %v1261 = vunpack.c.l.b16 %v433
    %v1262 = vunpack.c.h.b16 %v433
    %v1263 = vunpack.c.l.b16 %v434
    %v1264 = vunpack.c.h.b16 %v434
    %v1265 = vunpack.c.l.b16 %v435
    %v1266 = vunpack.c.h.b16 %v435
    %v1267 = vunpack.c.l.b16 %v436
    %v1268 = vunpack.c.h.b16 %v436
    %v1269 = vunpack.c.l.b16 %v437
    %v1270 = vunpack.c.h.b16 %v437
    %v1271 = vunpack.c.l.b16 %v438
    %v1272 = vunpack.c.h.b16 %v438
    %v1273 = vunpack.c.l.b16 %v439
    %v1274 = vunpack.c.h.b16 %v439
    %v1275 = vunpack.c.l.b16 %v440
    %v1276 = vunpack.c.h.b16 %v440
    %v1277 = vunpack.c.l.b16 %v441
    %v1278 = vunpack.c.h.b16 %v441
    %v1279 = vunpack.c.l.b16 %v442
    %v1280 = vunpack.c.h.b16 %v442
    %v1281 = vunpack.c.l.b16 %v443
    %v1282 = vunpack.c.h.b16 %v443
    %v1283 = vunpack.c.l.b16 %v444
    %v1284 = vunpack.c.h.b16 %v444
    %v1285 = vunpack.c.l.b16 %v445
    %v1286 = vunpack.c.h.b16 %v445
    %v1287 = vunpack.c.l.b16 %v446
    %v1288 = vunpack.c.h.b16 %v446
    %v1289 = vunpack.c.l.b16 %v447
    %v1290 = vunpack.c.h.b16 %v447
    %v1291 = vunpack.c.l.b16 %v448
    %v1292 = vunpack.c.h.b16 %v448
    %v1293 = vunpack.c.l.b16 %v449
    %v1294 = vunpack.c.h.b16 %v449
    %v1295 = vunpack.c.l.b16 %v450
    %v1296 = vunpack.c.h.b16 %v450
    %v1297 = vunpack.c.l.b16 %v451
    %v1298 = vunpack.c.h.b16 %v451
    %v1299 = vunpack.c.l.b16 %v452
    %v1300 = vunpack.c.h.b16 %v452
    %v1301 = vunpack.c.l.b16 %v453
    %v1302 = vunpack.c.h.b16 %v453
    %v1303 = vunpack.c.l.b16 %v454
    %v1304 = vunpack.c.h.b16 %v454
    %v1305 = vunpack.c.l.b16 %v455
    %v1306 = vunpack.c.h.b16 %v455
    %v1307 = vunpack.c.l.b16 %v456
    %v1308 = vunpack.c.h.b16 %v456
    %v1309 = vunpack.c.l.b16 %v457
    %v1310 = vunpack.c.h.b16 %v457
    %v1311 = vunpack.c.l.b16 %v458
    %v1312 = vunpack.c.h.b16 %v458
    %v1313 = vunpack.c.l.b16 %v459
    %v1314 = vunpack.c.h.b16 %v459
    %v1315 = vunpack.c.l.b16 %v460
    %v1316 = vunpack.c.h.b16 %v460
    %v1317 = vunpack.c.l.b16 %v461
    %v1318 = vunpack.c.h.b16 %v461
    %v1319 = vunpack.c.l.b16 %v462
    %v1320 = vunpack.c.h.b16 %v462
    %v1321 = vunpack.c.l.b16 %v463
    %v1322 = vunpack.c.h.b16 %v463
    %v1323 = vunpack.c.l.b16 %v464
    %v1324 = vunpack.c.h.b16 %v464
    %v1325 = vunpack.c.l.b16 %v465
    %v1326 = vunpack.c.h.b16 %v465
    %v1327 = vunpack.c.l.b16 %v466
    %v1328 = vunpack.c.h.b16 %v466
    %v1329 = vunpack.c.l.b16 %v467
    %v1330 = vunpack.c.h.b16 %v467
    %v1331 = vunpack.c.l.b16 %v468
    %v1332 = vunpack.c.h.b16 %v468
    %v1333 = vpack.c.b16 %v763, %v757
    %v1334 = vpack.c.b16 %v764, %v758
    %v1335 = vpack.c.b16 %v765, %v759
    %v1336 = vpack.c.b16 %v766, %v760
    %v1337 = vpack.c.b16 %v767, %v761
    %v1338 = vpack.c.b16 %v768, %v762
    %v1339 = vpack.c.b16 %v775, %v769
    %v1340 = vpack.c.b16 %v776, %v770
    %v1341 = vpack.c.b16 %v777, %v771
    %v1342 = vpack.c.b16 %v778, %v772
    %v1343 = vpack.c.b16 %v779, %v773
    %v1344 = vpack.c.b16 %v780, %v774
    %v1345 = vpack.c.b16 %v787, %v781
    %v1346 = vpack.c.b16 %v788, %v782
    %v1347 = vpack.c.b16 %v789, %v783
    %v1348 = vpack.c.b16 %v790, %v784
    %v1349 = vpack.c.b16 %v791, %v785
    %v1350 = vpack.c.b16 %v792, %v786
    %v1351 = vpack.c.b16 %v799, %v793
    %v1352 = vpack.c.b16 %v800, %v794
    %v1353 = vpack.c.b16 %v801, %v795
    %v1354 = vpack.c.b16 %v802, %v796
    %v1355 = vpack.c.b16 %v803, %v797
    %v1356 = vpack.c.b16 %v804, %v798
    %v1357 = vpack.c.b16 %v811, %v805
    %v1358 = vpack.c.b16 %v812, %v806
    %v1359 = vpack.c.b16 %v813, %v807
    %v1360 = vpack.c.b16 %v814, %v808
    %v1361 = vpack.c.b16 %v815, %v809
    %v1362 = vpack.c.b16 %v816, %v810
    %v1363 = vpack.c.b16 %v823, %v817
    %v1364 = vpack.c.b16 %v824, %v818
    %v1365 = vpack.c.b16 %v825, %v819
    %v1366 = vpack.c.b16 %v826, %v820
    %v1367 = vpack.c.b16 %v827, %v821
    %v1368 = vpack.c.b16 %v828, %v822
    %v1369 = vpack.c.b16 %v835, %v829
    %v1370 = vpack.c.b16 %v836, %v830
    %v1371 = vpack.c.b16 %v837, %v831
    %v1372 = vpack.c.b16 %v838, %v832
    %v1373 = vpack.c.b16 %v839, %v833
    %v1374 = vpack.c.b16 %v840, %v834
    %v1375 = vpack.c.b16 %v847, %v841
    %v1376 = vpack.c.b16 %v848, %v842
    %v1377 = vpack.c.b16 %v849, %v843
    %v1378 = vpack.c.b16 %v850, %v844
    %v1379 = vpack.c.b16 %v851, %v845
    %v1380 = vpack.c.b16 %v852, %v846
    %v1381 = vpack.c.b16 %v859, %v853
    %v1382 = vpack.c.b16 %v860, %v854
    %v1383 = vpack.c.b16 %v861, %v855
    %v1384 = vpack.c.b16 %v862, %v856
    %v1385 = vpack.c.b16 %v863, %v857
    %v1386 = vpack.c.b16 %v864, %v858
    %v1387 = vpack.c.b16 %v871, %v865
    %v1388 = vpack.c.b16 %v872, %v866
    %v1389 = vpack.c.b16 %v873, %v867
    %v1390 = vpack.c.b16 %v874, %v868
    %v1391 = vpack.c.b16 %v875, %v869
    %v1392 = vpack.c.b16 %v876, %v870
    %v1393 = vpack.c.b16 %v883, %v877
    %v1394 = vpack.c.b16 %v884, %v878
    %v1395 = vpack.c.b16 %v885, %v879
    %v1396 = vpack.c.b16 %v886, %v880
    %v1397 = vpack.c.b16 %v887, %v881
    %v1398 = vpack.c.b16 %v888, %v882
    %v1399 = vpack.c.b16 %v895, %v889
    %v1400 = vpack.c.b16 %v896, %v890
    %v1401 = vpack.c.b16 %v897, %v891
    %v1402 = vpack.c.b16 %v898, %v892
    %v1403 = vpack.c.b16 %v899, %v893
    %v1404 = vpack.c.b16 %v900, %v894
    %v1405 = vpack.c.b16 %v907, %v901
    %v1406 = vpack.c.b16 %v908, %v902
    %v1407 = vpack.c.b16 %v909, %v903
    %v1408 = vpack.c.b16 %v910, %v904
    %v1409 = vpack.c.b16 %v911, %v905
    %v1410 = vpack.c.b16 %v912, %v906
    %v1411 = vpack.c.b16 %v919, %v913
    %v1412 = vpack.c.b16 %v920, %v914
    %v1413 = vpack.c.b16 %v921, %v915
    %v1414 = vpack.c.b16 %v922, %v916
    %v1415 = vpack.c.b16 %v923, %v917
    %v1416 = vpack.c.b16 %v924, %v918
    %v1417 = vpack.c.b16 %v931, %v925
    %v1418 = vpack.c.b16 %v932, %v926
    %v1419 = vpack.c.b16 %v933, %v927
    %v1420 = vpack.c.b16 %v934, %v928
    %v1421 = vpack.c.b16 %v935, %v929
    %v1422 = vpack.c.b16 %v936, %v930
    %v1423 = vpack.c.b16 %v943, %v937
    %v1424 = vpack.c.b16 %v944, %v938
    %v1425 = vpack.c.b16 %v945, %v939
    %v1426 = vpack.c.b16 %v946, %v940
    %v1427 = vpack.c.b16 %v947, %v941
    %v1428 = vpack.c.b16 %v948, %v942
    %v1429 = vpack.c.b16 %v955, %v949
    %v1430 = vpack.c.b16 %v956, %v950
    %v1431 = vpack.c.b16 %v957, %v951
    %v1432 = vpack.c.b16 %v958, %v952
    %v1433 = vpack.c.b16 %v959, %v953
    %v1434 = vpack.c.b16 %v960, %v954
    %v1435 = vpack.c.b16 %v967, %v961
    %v1436 = vpack.c.b16 %v968, %v962
    %v1437 = vpack.c.b16 %v969, %v963
    %v1438 = vpack.c.b16 %v970, %v964
    %v1439 = vpack.c.b16 %v971, %v965
    %v1440 = vpack.c.b16 %v972, %v966
    %v1441 = vpack.c.b16 %v979, %v973
    %v1442 = vpack.c.b16 %v980, %v974
    %v1443 = vpack.c.b16 %v981, %v975
    %v1444 = vpack.c.b16 %v982, %v976
    %v1445 = vpack.c.b16 %v983, %v977
    %v1446 = vpack.c.b16 %v984, %v978
    %v1447 = vpack.c.b16 %v991, %v985
    %v1448 = vpack.c.b16 %v992, %v986
    %v1449 = vpack.c.b16 %v993, %v987
    %v1450 = vpack.c.b16 %v994, %v988
    %v1451 = vpack.c.b16 %v995, %v989
    %v1452 = vpack.c.b16 %v996, %v990
    %v1453 = vpack.c.b16 %v1003, %v997
    %v1454 = vpack.c.b16 %v1004, %v998
    %v1455 = vpack.c.b16 %v1005, %v999
    %v1456 = vpack.c.b16 %v1006, %v1000
    %v1457 = vpack.c.b16 %v1007, %v1001
    %v1458 = vpack.c.b16 %v1008, %v1002
    %v1459 = vpack.c.b16 %v1015, %v1009
    %v1460 = vpack.c.b16 %v1016, %v1010
    %v1461 = vpack.c.b16 %v1017, %v1011
    %v1462 = vpack.c.b16 %v1018, %v1012
    %v1463 = vpack.c.b16 %v1019, %v1013
    %v1464 = vpack.c.b16 %v1020, %v1014
    %v1465 = vpack.c.b16 %v1027, %v1021
    %v1466 = vpack.c.b16 %v1028, %v1022
    %v1467 = vpack.c.b16 %v1029, %v1023
    %v1468 = vpack.c.b16 %v1030, %v1024
    %v1469 = vpack.c.b16 %v1031, %v1025
    %v1470 = vpack.c.b16 %v1032, %v1026
    %v1471 = vpack.c.b16 %v1039, %v1033
    %v1472 = vpack.c.b16 %v1040, %v1034
    %v1473 = vpack.c.b16 %v1041, %v1035
    %v1474 = vpack.c.b16 %v1042, %v1036
    %v1475 = vpack.c.b16 %v1043, %v1037
    %v1476 = vpack.c.b16 %v1044, %v1038
    %v1477 = vpack.c.b16 %v1051, %v1045
    %v1478 = vpack.c.b16 %v1052, %v1046
    %v1479 = vpack.c.b16 %v1053, %v1047
    %v1480 = vpack.c.b16 %v1054, %v1048
    %v1481 = vpack.c.b16 %v1055, %v1049
    %v1482 = vpack.c.b16 %v1056, %v1050
    %v1483 = vpack.c.b16 %v1063, %v1057
    %v1484 = vpack.c.b16 %v1064, %v1058
    %v1485 = vpack.c.b16 %v1065, %v1059
    %v1486 = vpack.c.b16 %v1066, %v1060
    %v1487 = vpack.c.b16 %v1067, %v1061
    %v1488 = vpack.c.b16 %v1068, %v1062
    %v1489 = vpack.c.b16 %v1075, %v1069
    %v1490 = vpack.c.b16 %v1076, %v1070
    %v1491 = vpack.c.b16 %v1077, %v1071
    %v1492 = vpack.c.b16 %v1078, %v1072
    %v1493 = vpack.c.b16 %v1079, %v1073
    %v1494 = vpack.c.b16 %v1080, %v1074
    %v1495 = vpack.c.b16 %v1087, %v1081
    %v1496 = vpack.c.b16 %v1088, %v1082
    %v1497 = vpack.c.b16 %v1089, %v1083
    %v1498 = vpack.c.b16 %v1090, %v1084
    %v1499 = vpack.c.b16 %v1091, %v1085
    %v1500 = vpack.c.b16 %v1092, %v1086
    %v1501 = vpack.c.b16 %v1099, %v1093
    %v1502 = vpack.c.b16 %v1100, %v1094
    %v1503 = vpack.c.b16 %v1101, %v1095
    %v1504 = vpack.c.b16 %v1102, %v1096
    %v1505 = vpack.c.b16 %v1103, %v1097
    %v1506 = vpack.c.b16 %v1104, %v1098
    %v1507 = vpack.c.b16 %v1111, %v1105
    %v1508 = vpack.c.b16 %v1112, %v1106
    %v1509 = vpack.c.b16 %v1113, %v1107
    %v1510 = vpack.c.b16 %v1114, %v1108
    %v1511 = vpack.c.b16 %v1115, %v1109
    %v1512 = vpack.c.b16 %v1116, %v1110
    %v1513 = vpack.c.b16 %v1123, %v1117
    %v1514 = vpack.c.b16 %v1124, %v1118
    %v1515 = vpack.c.b16 %v1125, %v1119
    %v1516 = vpack.c.b16 %v1126, %v1120
    %v1517 = vpack.c.b16 %v1127, %v1121
    %v1518 = vpack.c.b16 %v1128, %v1122
    %v1519 = vpack.c.b16 %v1135, %v1129
    %v1520 = vpack.c.b16 %v1136, %v1130
    %v1521 = vpack.c.b16 %v1137, %v1131
    %v1522 = vpack.c.b16 %v1138, %v1132
    %v1523 = vpack.c.b16 %v1139, %v1133
    %v1524 = vpack.c.b16 %v1140, %v1134
    %v1525 = vpack.c.b16 %v1147, %v1141
    %v1526 = vpack.c.b16 %v1148, %v1142
    %v1527 = vpack.c.b16 %v1149, %v1143
    %v1528 = vpack.c.b16 %v1150, %v1144
    %v1529 = vpack.c.b16 %v1151, %v1145
    %v1530 = vpack.c.b16 %v1152, %v1146
    %v1531 = vpack.c.b16 %v1159, %v1153
    %v1532 = vpack.c.b16 %v1160, %v1154
    %v1533 = vpack.c.b16 %v1161, %v1155
    %v1534 = vpack.c.b16 %v1162, %v1156
    %v1535 = vpack.c.b16 %v1163, %v1157
    %v1536 = vpack.c.b16 %v1164, %v1158
    %v1537 = vpack.c.b16 %v1171, %v1165
    %v1538 = vpack.c.b16 %v1172, %v1166
    %v1539 = vpack.c.b16 %v1173, %v1167
    %v1540 = vpack.c.b16 %v1174, %v1168
    %v1541 = vpack.c.b16 %v1175, %v1169
    %v1542 = vpack.c.b16 %v1176, %v1170
    %v1543 = vpack.c.b16 %v1183, %v1177
    %v1544 = vpack.c.b16 %v1184, %v1178
    %v1545 = vpack.c.b16 %v1185, %v1179
    %v1546 = vpack.c.b16 %v1186, %v1180
    %v1547 = vpack.c.b16 %v1187, %v1181
    %v1548 = vpack.c.b16 %v1188, %v1182
    %v1549 = vpack.c.b16 %v1195, %v1189
    %v1550 = vpack.c.b16 %v1196, %v1190
    %v1551 = vpack.c.b16 %v1197, %v1191
    %v1552 = vpack.c.b16 %v1198, %v1192
    %v1553 = vpack.c.b16 %v1199, %v1193
    %v1554 = vpack.c.b16 %v1200, %v1194
    %v1555 = vpack.c.b16 %v1207, %v1201
    %v1556 = vpack.c.b16 %v1208, %v1202
    %v1557 = vpack.c.b16 %v1209, %v1203
    %v1558 = vpack.c.b16 %v1210, %v1204
    %v1559 = vpack.c.b16 %v1211, %v1205
    %v1560 = vpack.c.b16 %v1212, %v1206
    %v1561 = vpack.c.b16 %v1219, %v1213
    %v1562 = vpack.c.b16 %v1220, %v1214
    %v1563 = vpack.c.b16 %v1221, %v1215
    %v1564 = vpack.c.b16 %v1222, %v1216
    %v1565 = vpack.c.b16 %v1223, %v1217
    %v1566 = vpack.c.b16 %v1224, %v1218
    %v1567 = vpack.c.b16 %v1231, %v1225
    %v1568 = vpack.c.b16 %v1232, %v1226
    %v1569 = vpack.c.b16 %v1233, %v1227
    %v1570 = vpack.c.b16 %v1234, %v1228
    %v1571 = vpack.c.b16 %v1235, %v1229
    %v1572 = vpack.c.b16 %v1236, %v1230
    %v1573 = vpack.c.b16 %v1243, %v1237
    %v1574 = vpack.c.b16 %v1244, %v1238
    %v1575 = vpack.c.b16 %v1245, %v1239
    %v1576 = vpack.c.b16 %v1246, %v1240
    %v1577 = vpack.c.b16 %v1247, %v1241
    %v1578 = vpack.c.b16 %v1248, %v1242
    %v1579 = vpack.c.b16 %v1255, %v1249
    %v1580 = vpack.c.b16 %v1256, %v1250
    %v1581 = vpack.c.b16 %v1257, %v1251
    %v1582 = vpack.c.b16 %v1258, %v1252
    %v1583 = vpack.c.b16 %v1259, %v1253
    %v1584 = vpack.c.b16 %v1260, %v1254
    %v1585 = vpack.c.b16 %v1267, %v1261
    %v1586 = vpack.c.b16 %v1268, %v1262
    %v1587 = vpack.c.b16 %v1269, %v1263
    %v1588 = vpack.c.b16 %v1270, %v1264
    %v1589 = vpack.c.b16 %v1271, %v1265
    %v1590 = vpack.c.b16 %v1272, %v1266
    %v1591 = vpack.c.b16 %v1279, %v1273
    %v1592 = vpack.c.b16 %v1280, %v1274
    %v1593 = vpack.c.b16 %v1281, %v1275
    %v1594 = vpack.c.b16 %v1282, %v1276
    %v1595 = vpack.c.b16 %v1283, %v1277
    %v1596 = vpack.c.b16 %v1284, %v1278
    %v1597 = vpack.c.b16 %v1291, %v1285
    %v1598 = vpack.c.b16 %v1292, %v1286
    %v1599 = vpack.c.b16 %v1293, %v1287
    %v1600 = vpack.c.b16 %v1294, %v1288
    %v1601 = vpack.c.b16 %v1295, %v1289
    %v1602 = vpack.c.b16 %v1296, %v1290
    %v1603 = vpack.c.b16 %v1303, %v1297
    %v1604 = vpack.c.b16 %v1304, %v1298
    %v1605 = vpack.c.b16 %v1305, %v1299
    %v1606 = vpack.c.b16 %v1306, %v1300
    %v1607 = vpack.c.b16 %v1307, %v1301
    %v1608 = vpack.c.b16 %v1308, %v1302
    %v1609 = vpack.c.b16 %v1315, %v1309
    %v1610 = vpack.c.b16 %v1316, %v1310
    %v1611 = vpack.c.b16 %v1317, %v1311
    %v1612 = vpack.c.b16 %v1318, %v1312
    %v1613 = vpack.c.b16 %v1319, %v1313
    %v1614 = vpack.c.b16 %v1320, %v1314
    %v1615 = vpack.c.b16 %v1327, %v1321
    %v1616 = vpack.c.b16 %v1328, %v1322
    %v1617 = vpack.c.b16 %v1329, %v1323
    %v1618 = vpack.c.b16 %v1330, %v1324
    %v1619 = vpack.c.b16 %v1331, %v1325
    %v1620 = vpack.c.b16 %v1332, %v1326
    %1909 = vmatprep.subr.bf16.mxu0 %v1376
    %1910 = vmatpush1.bf16.msra.mxu0 %v1375
    %1911 = vmatprep.subr.bf16.mxu0 %v1370
    %1912 = vmatpush1.bf16.msra.mxu0 %v1369
    %1913 = vmatprep.subr.bf16.mxu0 %v1364
    %1914 = vmatpush1.bf16.msra.mxu0 %v1363
    %1915 = vmatprep.subr.bf16.mxu0 %v1358
    %1916 = vmatpush1.bf16.msra.mxu0 %v1357
    %1917 = vmatprep.subr.bf16.mxu0 %v1352
    %1918 = vmatpush1.bf16.msra.mxu0 %v1351
    %1919 = vmatprep.subr.bf16.mxu0 %v1346
    %1920 = vmatpush1.bf16.msra.mxu0 %v1345
    %1921 = vmatprep.subr.bf16.mxu0 %v1340
    %1922 = vmatpush1.bf16.msra.mxu0 %v1339
    %1923 = vmatprep.subr.bf16.mxu0 %v1334
    %1924 = vmatpush1.bf16.msra.mxu0 %v1333
    %1925 = vmatprep.subr.bf16.mxu0 %v1424
    %1926 = vmatpush2.bf16.msra.mxu0 %v1423
    %1927 = vmatprep.subr.bf16.mxu0 %v1418
    %1928 = vmatpush2.bf16.msra.mxu0 %v1417
    %1929 = vmatprep.subr.bf16.mxu0 %v1412
    %1930 = vmatpush2.bf16.msra.mxu0 %v1411
    %1931 = vmatprep.subr.bf16.mxu0 %v1406
    %1932 = vmatpush2.bf16.msra.mxu0 %v1405
    %1933 = vmatprep.subr.bf16.mxu0 %v1400
    %1934 = vmatpush2.bf16.msra.mxu0 %v1399
    %1935 = vmatprep.subr.bf16.mxu0 %v1394
    %1936 = vmatpush2.bf16.msra.mxu0 %v1393
    %1937 = vmatprep.subr.bf16.mxu0 %v1388
    %1938 = vmatpush2.bf16.msra.mxu0 %v1387
    %1939 = vmatprep.subr.bf16.mxu0 %v1382
    %1940 = vmatpush2.bf16.msra.mxu0 %v1381
    %1941 = vmatprep.mubr.bf16.mxu0 %v176
    %1942 = vmatmul.mubr.bf16.gmra.mxu0 %v175
    %v1943 = vpop.f32.mrf.mxu0
    %v1944 = vadd.f32 0.0, %v1943
    %v1945 = vpop.f32.mrf.mxu0
    %v1946 = vadd.f32 0.0, %v1945
    %v1947 = vpop.f32.mrf.mxu0
    %v1948 = vpop.f32.mrf.mxu0
    %1949 = vdwg.mxu0
    %1950 = vmatprep.subr.bf16.mxu0 %v1472
    %1951 = vmatpush1.bf16.msra.mxu0 %v1471
    %1952 = vmatprep.subr.bf16.mxu0 %v1466
    %1953 = vmatpush1.bf16.msra.mxu0 %v1465
    %1954 = vmatprep.subr.bf16.mxu0 %v1460
    %1955 = vmatpush1.bf16.msra.mxu0 %v1459
    %1956 = vmatprep.subr.bf16.mxu0 %v1454
    %1957 = vmatpush1.bf16.msra.mxu0 %v1453
    %1958 = vmatprep.subr.bf16.mxu0 %v1448
    %1959 = vmatpush1.bf16.msra.mxu0 %v1447
    %1960 = vmatprep.subr.bf16.mxu0 %v1442
    %1961 = vmatpush1.bf16.msra.mxu0 %v1441
    %1962 = vmatprep.subr.bf16.mxu0 %v1436
    %1963 = vmatpush1.bf16.msra.mxu0 %v1435
    %1964 = vmatprep.subr.bf16.mxu0 %v1430
    %1965 = vmatpush1.bf16.msra.mxu0 %v1429
    %1966 = vmatprep.subr.bf16.mxu0 %v1520
    %1967 = vmatpush2.bf16.msra.mxu0 %v1519
    %1968 = vmatprep.subr.bf16.mxu0 %v1514
    %1969 = vmatpush2.bf16.msra.mxu0 %v1513
    %1970 = vmatprep.subr.bf16.mxu0 %v1508
    %1971 = vmatpush2.bf16.msra.mxu0 %v1507
    %1972 = vmatprep.subr.bf16.mxu0 %v1502
    %1973 = vmatpush2.bf16.msra.mxu0 %v1501
    %1974 = vmatprep.subr.bf16.mxu0 %v1496
    %1975 = vmatpush2.bf16.msra.mxu0 %v1495
    %1976 = vmatprep.subr.bf16.mxu0 %v1490
    %1977 = vmatpush2.bf16.msra.mxu0 %v1489
    %1978 = vmatprep.subr.bf16.mxu0 %v1484
    %1979 = vmatpush2.bf16.msra.mxu0 %v1483
    %1980 = vmatprep.subr.bf16.mxu0 %v1478
    %1981 = vmatpush2.bf16.msra.mxu0 %v1477
    %1982 = vmatprep.mubr.bf16.mxu0 %v178
    %1983 = vmatmul.mubr.bf16.gmra.mxu0 %v177
    %v1984 = vpop.f32.mrf.mxu0
    %v1985 = vadd.f32 %v1944, %v1984
    %v1986 = vpop.f32.mrf.mxu0
    %v1987 = vadd.f32 %v1946, %v1986
    %v1988 = vpop.f32.mrf.mxu0
    %v1989 = vpop.f32.mrf.mxu0
    %1990 = vdwg.mxu0
    %1991 = vmatprep.subr.bf16.mxu0 %v1568
    %1992 = vmatpush1.bf16.msra.mxu0 %v1567
    %1993 = vmatprep.subr.bf16.mxu0 %v1562
    %1994 = vmatpush1.bf16.msra.mxu0 %v1561
    %1995 = vmatprep.subr.bf16.mxu0 %v1556
    %1996 = vmatpush1.bf16.msra.mxu0 %v1555
    %1997 = vmatprep.subr.bf16.mxu0 %v1550
    %1998 = vmatpush1.bf16.msra.mxu0 %v1549
    %1999 = vmatprep.subr.bf16.mxu0 %v1544
    %2000 = vmatpush1.bf16.msra.mxu0 %v1543
    %2001 = vmatprep.subr.bf16.mxu0 %v1538
    %2002 = vmatpush1.bf16.msra.mxu0 %v1537
    %2003 = vmatprep.subr.bf16.mxu0 %v1532
    %2004 = vmatpush1.bf16.msra.mxu0 %v1531
    %2005 = vmatprep.subr.bf16.mxu0 %v1526
    %2006 = vmatpush1.bf16.msra.mxu0 %v1525
    %2007 = vmatprep.subr.bf16.mxu0 %v1616
    %2008 = vmatpush2.bf16.msra.mxu0 %v1615
    %2009 = vmatprep.subr.bf16.mxu0 %v1610
    %2010 = vmatpush2.bf16.msra.mxu0 %v1609
    %2011 = vmatprep.subr.bf16.mxu0 %v1604
    %2012 = vmatpush2.bf16.msra.mxu0 %v1603
    %2013 = vmatprep.subr.bf16.mxu0 %v1598
    %2014 = vmatpush2.bf16.msra.mxu0 %v1597
    %2015 = vmatprep.subr.bf16.mxu0 %v1592
    %2016 = vmatpush2.bf16.msra.mxu0 %v1591
    %2017 = vmatprep.subr.bf16.mxu0 %v1586
    %2018 = vmatpush2.bf16.msra.mxu0 %v1585
    %2019 = vmatprep.subr.bf16.mxu0 %v1580
    %2020 = vmatpush2.bf16.msra.mxu0 %v1579
    %2021 = vmatprep.subr.bf16.mxu0 %v1574
    %2022 = vmatpush2.bf16.msra.mxu0 %v1573
    %2023 = vmatprep.mubr.bf16.mxu0 %v180
    %2024 = vmatmul.mubr.bf16.gmra.mxu0 %v179
    %v2025 = vpop.f32.mrf.mxu0
    %v2026 = vadd.f32 %v1985, %v2025
    %v2027 = vpop.f32.mrf.mxu0
    %v2028 = vadd.f32 %v1987, %v2027
    %v2029 = vpop.f32.mrf.mxu0
    %v2030 = vpop.f32.mrf.mxu0
    %2031 = vdwg.mxu0
    %2032 = vmatprep.subr.bf16.mxu0 %v1378
    %2033 = vmatpush1.bf16.msra.mxu0 %v1377
    %2034 = vmatprep.subr.bf16.mxu0 %v1372
    %2035 = vmatpush1.bf16.msra.mxu0 %v1371
    %2036 = vmatprep.subr.bf16.mxu0 %v1366
    %2037 = vmatpush1.bf16.msra.mxu0 %v1365
    %2038 = vmatprep.subr.bf16.mxu0 %v1360
    %2039 = vmatpush1.bf16.msra.mxu0 %v1359
    %2040 = vmatprep.subr.bf16.mxu0 %v1354
    %2041 = vmatpush1.bf16.msra.mxu0 %v1353
    %2042 = vmatprep.subr.bf16.mxu0 %v1348
    %2043 = vmatpush1.bf16.msra.mxu0 %v1347
    %2044 = vmatprep.subr.bf16.mxu0 %v1342
    %2045 = vmatpush1.bf16.msra.mxu0 %v1341
    %2046 = vmatprep.subr.bf16.mxu0 %v1336
    %2047 = vmatpush1.bf16.msra.mxu0 %v1335
    %2048 = vmatprep.subr.bf16.mxu0 %v1426
    %2049 = vmatpush2.bf16.msra.mxu0 %v1425
    %2050 = vmatprep.subr.bf16.mxu0 %v1420
    %2051 = vmatpush2.bf16.msra.mxu0 %v1419
    %2052 = vmatprep.subr.bf16.mxu0 %v1414
    %2053 = vmatpush2.bf16.msra.mxu0 %v1413
    %2054 = vmatprep.subr.bf16.mxu0 %v1408
    %2055 = vmatpush2.bf16.msra.mxu0 %v1407
    %2056 = vmatprep.subr.bf16.mxu0 %v1402
    %2057 = vmatpush2.bf16.msra.mxu0 %v1401
    %2058 = vmatprep.subr.bf16.mxu0 %v1396
    %2059 = vmatpush2.bf16.msra.mxu0 %v1395
    %2060 = vmatprep.subr.bf16.mxu0 %v1390
    %2061 = vmatpush2.bf16.msra.mxu0 %v1389
    %2062 = vmatprep.subr.bf16.mxu0 %v1384
    %2063 = vmatpush2.bf16.msra.mxu0 %v1383
    %2064 = vmatprep.mubr.bf16.mxu0 %v176
    %2065 = vmatmul.mubr.bf16.gmra.mxu0 %v175
    %v2066 = vpop.f32.mrf.mxu0
    %v2067 = vadd.f32 0.0, %v2066
    %v2068 = vpop.f32.mrf.mxu0
    %v2069 = vadd.f32 0.0, %v2068
    %v2070 = vpop.f32.mrf.mxu0
    %v2071 = vpop.f32.mrf.mxu0
    %2072 = vdwg.mxu0
    %2073 = vmatprep.subr.bf16.mxu0 %v1474
    %2074 = vmatpush1.bf16.msra.mxu0 %v1473
    %2075 = vmatprep.subr.bf16.mxu0 %v1468
    %2076 = vmatpush1.bf16.msra.mxu0 %v1467
    %2077 = vmatprep.subr.bf16.mxu0 %v1462
    %2078 = vmatpush1.bf16.msra.mxu0 %v1461
    %2079 = vmatprep.subr.bf16.mxu0 %v1456
    %2080 = vmatpush1.bf16.msra.mxu0 %v1455
    %2081 = vmatprep.subr.bf16.mxu0 %v1450
    %2082 = vmatpush1.bf16.msra.mxu0 %v1449
    %2083 = vmatprep.subr.bf16.mxu0 %v1444
    %2084 = vmatpush1.bf16.msra.mxu0 %v1443
    %2085 = vmatprep.subr.bf16.mxu0 %v1438
    %2086 = vmatpush1.bf16.msra.mxu0 %v1437
    %2087 = vmatprep.subr.bf16.mxu0 %v1432
    %2088 = vmatpush1.bf16.msra.mxu0 %v1431
    %2089 = vmatprep.subr.bf16.mxu0 %v1522
    %2090 = vmatpush2.bf16.msra.mxu0 %v1521
    %2091 = vmatprep.subr.bf16.mxu0 %v1516
    %2092 = vmatpush2.bf16.msra.mxu0 %v1515
    %2093 = vmatprep.subr.bf16.mxu0 %v1510
    %2094 = vmatpush2.bf16.msra.mxu0 %v1509
    %2095 = vmatprep.subr.bf16.mxu0 %v1504
    %2096 = vmatpush2.bf16.msra.mxu0 %v1503
    %2097 = vmatprep.subr.bf16.mxu0 %v1498
    %2098 = vmatpush2.bf16.msra.mxu0 %v1497
    %2099 = vmatprep.subr.bf16.mxu0 %v1492
    %2100 = vmatpush2.bf16.msra.mxu0 %v1491
    %2101 = vmatprep.subr.bf16.mxu0 %v1486
    %2102 = vmatpush2.bf16.msra.mxu0 %v1485
    %2103 = vmatprep.subr.bf16.mxu0 %v1480
    %2104 = vmatpush2.bf16.msra.mxu0 %v1479
    %2105 = vmatprep.mubr.bf16.mxu0 %v178
    %2106 = vmatmul.mubr.bf16.gmra.mxu0 %v177
    %v2107 = vpop.f32.mrf.mxu0
    %v2108 = vadd.f32 %v2067, %v2107
    %v2109 = vpop.f32.mrf.mxu0
    %v2110 = vadd.f32 %v2069, %v2109
    %v2111 = vpop.f32.mrf.mxu0
    %v2112 = vpop.f32.mrf.mxu0
    %2113 = vdwg.mxu0
    %2114 = vmatprep.subr.bf16.mxu0 %v1570
    %2115 = vmatpush1.bf16.msra.mxu0 %v1569
    %2116 = vmatprep.subr.bf16.mxu0 %v1564
    %2117 = vmatpush1.bf16.msra.mxu0 %v1563
    %2118 = vmatprep.subr.bf16.mxu0 %v1558
    %2119 = vmatpush1.bf16.msra.mxu0 %v1557
    %2120 = vmatprep.subr.bf16.mxu0 %v1552
    %2121 = vmatpush1.bf16.msra.mxu0 %v1551
    %2122 = vmatprep.subr.bf16.mxu0 %v1546
    %2123 = vmatpush1.bf16.msra.mxu0 %v1545
    %2124 = vmatprep.subr.bf16.mxu0 %v1540
    %2125 = vmatpush1.bf16.msra.mxu0 %v1539
    %2126 = vmatprep.subr.bf16.mxu0 %v1534
    %2127 = vmatpush1.bf16.msra.mxu0 %v1533
    %2128 = vmatprep.subr.bf16.mxu0 %v1528
    %2129 = vmatpush1.bf16.msra.mxu0 %v1527
    %2130 = vmatprep.subr.bf16.mxu0 %v1618
    %2131 = vmatpush2.bf16.msra.mxu0 %v1617
    %2132 = vmatprep.subr.bf16.mxu0 %v1612
    %2133 = vmatpush2.bf16.msra.mxu0 %v1611
    %2134 = vmatprep.subr.bf16.mxu0 %v1606
    %2135 = vmatpush2.bf16.msra.mxu0 %v1605
    %2136 = vmatprep.subr.bf16.mxu0 %v1600
    %2137 = vmatpush2.bf16.msra.mxu0 %v1599
    %2138 = vmatprep.subr.bf16.mxu0 %v1594
    %2139 = vmatpush2.bf16.msra.mxu0 %v1593
    %2140 = vmatprep.subr.bf16.mxu0 %v1588
    %2141 = vmatpush2.bf16.msra.mxu0 %v1587
    %2142 = vmatprep.subr.bf16.mxu0 %v1582
    %2143 = vmatpush2.bf16.msra.mxu0 %v1581
    %2144 = vmatprep.subr.bf16.mxu0 %v1576
    %2145 = vmatpush2.bf16.msra.mxu0 %v1575
    %2146 = vmatprep.mubr.bf16.mxu0 %v180
    %2147 = vmatmul.mubr.bf16.gmra.mxu0 %v179
    %v2148 = vpop.f32.mrf.mxu0
    %v2149 = vadd.f32 %v2108, %v2148
    %v2150 = vpop.f32.mrf.mxu0
    %v2151 = vadd.f32 %v2110, %v2150
    %v2152 = vpop.f32.mrf.mxu0
    %v2153 = vpop.f32.mrf.mxu0
    %2154 = vdwg.mxu0
    %2155 = vmatprep.subr.bf16.mxu0 %v1380
    %2156 = vmatpush1.bf16.msra.mxu0 %v1379
    %2157 = vmatprep.subr.bf16.mxu0 %v1374
    %2158 = vmatpush1.bf16.msra.mxu0 %v1373
    %2159 = vmatprep.subr.bf16.mxu0 %v1368
    %2160 = vmatpush1.bf16.msra.mxu0 %v1367
    %2161 = vmatprep.subr.bf16.mxu0 %v1362
    %2162 = vmatpush1.bf16.msra.mxu0 %v1361
    %2163 = vmatprep.subr.bf16.mxu0 %v1356
    %2164 = vmatpush1.bf16.msra.mxu0 %v1355
    %2165 = vmatprep.subr.bf16.mxu0 %v1350
    %2166 = vmatpush1.bf16.msra.mxu0 %v1349
    %2167 = vmatprep.subr.bf16.mxu0 %v1344
    %2168 = vmatpush1.bf16.msra.mxu0 %v1343
    %2169 = vmatprep.subr.bf16.mxu0 %v1338
    %2170 = vmatpush1.bf16.msra.mxu0 %v1337
    %2171 = vmatprep.subr.bf16.mxu0 %v1428
    %2172 = vmatpush2.bf16.msra.mxu0 %v1427
    %2173 = vmatprep.subr.bf16.mxu0 %v1422
    %2174 = vmatpush2.bf16.msra.mxu0 %v1421
    %2175 = vmatprep.subr.bf16.mxu0 %v1416
    %2176 = vmatpush2.bf16.msra.mxu0 %v1415
    %2177 = vmatprep.subr.bf16.mxu0 %v1410
    %2178 = vmatpush2.bf16.msra.mxu0 %v1409
    %2179 = vmatprep.subr.bf16.mxu0 %v1404
    %2180 = vmatpush2.bf16.msra.mxu0 %v1403
    %2181 = vmatprep.subr.bf16.mxu0 %v1398
    %2182 = vmatpush2.bf16.msra.mxu0 %v1397
    %2183 = vmatprep.subr.bf16.mxu0 %v1392
    %2184 = vmatpush2.bf16.msra.mxu0 %v1391
    %2185 = vmatprep.subr.bf16.mxu0 %v1386
    %2186 = vmatpush2.bf16.msra.mxu0 %v1385
    %2187 = vmatprep.mubr.bf16.mxu0 %v176
    %2188 = vmatmul.mubr.bf16.gmra.mxu0 %v175
    %v2189 = vpop.f32.mrf.mxu0
    %v2190 = vadd.f32 0.0, %v2189
    %v2191 = vpop.f32.mrf.mxu0
    %v2192 = vadd.f32 0.0, %v2191
    %v2193 = vpop.f32.mrf.mxu0
    %v2194 = vpop.f32.mrf.mxu0
    %2195 = vdwg.mxu0
    %2196 = vmatprep.subr.bf16.mxu0 %v1476
    %2197 = vmatpush1.bf16.msra.mxu0 %v1475
    %2198 = vmatprep.subr.bf16.mxu0 %v1470
    %2199 = vmatpush1.bf16.msra.mxu0 %v1469
    %2200 = vmatprep.subr.bf16.mxu0 %v1464
    %2201 = vmatpush1.bf16.msra.mxu0 %v1463
    %2202 = vmatprep.subr.bf16.mxu0 %v1458
    %2203 = vmatpush1.bf16.msra.mxu0 %v1457
    %2204 = vmatprep.subr.bf16.mxu0 %v1452
    %2205 = vmatpush1.bf16.msra.mxu0 %v1451
    %2206 = vmatprep.subr.bf16.mxu0 %v1446
    %2207 = vmatpush1.bf16.msra.mxu0 %v1445
    %2208 = vmatprep.subr.bf16.mxu0 %v1440
    %2209 = vmatpush1.bf16.msra.mxu0 %v1439
    %2210 = vmatprep.subr.bf16.mxu0 %v1434
    %2211 = vmatpush1.bf16.msra.mxu0 %v1433
    %2212 = vmatprep.subr.bf16.mxu0 %v1524
    %2213 = vmatpush2.bf16.msra.mxu0 %v1523
    %2214 = vmatprep.subr.bf16.mxu0 %v1518
    %2215 = vmatpush2.bf16.msra.mxu0 %v1517
    %2216 = vmatprep.subr.bf16.mxu0 %v1512
    %2217 = vmatpush2.bf16.msra.mxu0 %v1511
    %2218 = vmatprep.subr.bf16.mxu0 %v1506
    %2219 = vmatpush2.bf16.msra.mxu0 %v1505
    %2220 = vmatprep.subr.bf16.mxu0 %v1500
    %2221 = vmatpush2.bf16.msra.mxu0 %v1499
    %2222 = vmatprep.subr.bf16.mxu0 %v1494
    %2223 = vmatpush2.bf16.msra.mxu0 %v1493
    %2224 = vmatprep.subr.bf16.mxu0 %v1488
    %2225 = vmatpush2.bf16.msra.mxu0 %v1487
    %2226 = vmatprep.subr.bf16.mxu0 %v1482
    %2227 = vmatpush2.bf16.msra.mxu0 %v1481
    %2228 = vmatprep.mubr.bf16.mxu0 %v178
    %2229 = vmatmul.mubr.bf16.gmra.mxu0 %v177
    %v2230 = vpop.f32.mrf.mxu0
    %v2231 = vadd.f32 %v2190, %v2230
    %v2232 = vpop.f32.mrf.mxu0
    %v2233 = vadd.f32 %v2192, %v2232
    %v2234 = vpop.f32.mrf.mxu0
    %v2235 = vpop.f32.mrf.mxu0
    %2236 = vdwg.mxu0
    %2237 = vmatprep.subr.bf16.mxu0 %v1572
    %2238 = vmatpush1.bf16.msra.mxu0 %v1571
    %2239 = vmatprep.subr.bf16.mxu0 %v1566
    %2240 = vmatpush1.bf16.msra.mxu0 %v1565
    %2241 = vmatprep.subr.bf16.mxu0 %v1560
    %2242 = vmatpush1.bf16.msra.mxu0 %v1559
    %2243 = vmatprep.subr.bf16.mxu0 %v1554
    %2244 = vmatpush1.bf16.msra.mxu0 %v1553
    %2245 = vmatprep.subr.bf16.mxu0 %v1548
    %2246 = vmatpush1.bf16.msra.mxu0 %v1547
    %2247 = vmatprep.subr.bf16.mxu0 %v1542
    %2248 = vmatpush1.bf16.msra.mxu0 %v1541
    %2249 = vmatprep.subr.bf16.mxu0 %v1536
    %2250 = vmatpush1.bf16.msra.mxu0 %v1535
    %2251 = vmatprep.subr.bf16.mxu0 %v1530
    %2252 = vmatpush1.bf16.msra.mxu0 %v1529
    %2253 = vmatprep.subr.bf16.mxu0 %v1620
    %2254 = vmatpush2.bf16.msra.mxu0 %v1619
    %2255 = vmatprep.subr.bf16.mxu0 %v1614
    %2256 = vmatpush2.bf16.msra.mxu0 %v1613
    %2257 = vmatprep.subr.bf16.mxu0 %v1608
    %2258 = vmatpush2.bf16.msra.mxu0 %v1607
    %2259 = vmatprep.subr.bf16.mxu0 %v1602
    %2260 = vmatpush2.bf16.msra.mxu0 %v1601
    %2261 = vmatprep.subr.bf16.mxu0 %v1596
    %2262 = vmatpush2.bf16.msra.mxu0 %v1595
    %2263 = vmatprep.subr.bf16.mxu0 %v1590
    %2264 = vmatpush2.bf16.msra.mxu0 %v1589
    %2265 = vmatprep.subr.bf16.mxu0 %v1584
    %2266 = vmatpush2.bf16.msra.mxu0 %v1583
    %2267 = vmatprep.subr.bf16.mxu0 %v1578
    %2268 = vmatpush2.bf16.msra.mxu0 %v1577
    %2269 = vmatprep.mubr.bf16.mxu0 %v180
    %2270 = vmatmul.mubr.bf16.gmra.mxu0 %v179
    %v2271 = vpop.f32.mrf.mxu0
    %v2272 = vadd.f32 %v2231, %v2271
    %v2273 = vpop.f32.mrf.mxu0
    %v2274 = vadd.f32 %v2233, %v2273
    %v2275 = vpop.f32.mrf.mxu0
    %v2276 = vpop.f32.mrf.mxu0
    %2277 = vdwg.mxu0
    %v2278 = vmax.f32 %v2026, 0.0
    %v2279 = vmax.f32 %v2028, 0.0
    %v2280 = vmax.f32 %v2149, 0.0
    %v2281 = vmax.f32 %v2151, 0.0
    %v2282 = vmax.f32 %v2272, 0.0
    %v2283 = vmax.f32 %v2274, 0.0
    %v2284 = vpack.c.bf16 %v2278, %v2278
    %v2285 = vpack.c.bf16 %v2279, %v2279
    %v2286 = vpack.c.bf16 %v2280, %v2280
    %v2287 = vpack.c.bf16 %v2281, %v2281
    %v2288 = vpack.c.bf16 %v2282, %v2282
    %v2289 = vpack.c.bf16 %v2283, %v2283
    %v2290 = vld [vmem:[#allocation8] sm:$0xff]
    %v2291 = vld [vmem:[#allocation8 + $0x8] sm:$0xff]
    %v2292 = vld [vmem:[#allocation8 + $0x10] sm:$0xff]
    %v2293 = vld [vmem:[#allocation8 + $0x18] sm:$0xff]
    %v2294 = vld [vmem:[#allocation8 + $0x20] sm:$0xff]
    %v2295 = vld [vmem:[#allocation8 + $0x28] sm:$0xff]
    %v2296 = vld [vmem:[#allocation8 + $0x30] sm:$0xff]
    %v2297 = vld [vmem:[#allocation8 + $0x38] sm:$0xff]
    %v2298 = vld [vmem:[#allocation8 + $0x40] sm:$0xff]
    %v2299 = vld [vmem:[#allocation8 + $0x48] sm:$0xff]
    %v2300 = vld [vmem:[#allocation8 + $0x50] sm:$0xff]
    %v2301 = vld [vmem:[#allocation8 + $0x58] sm:$0xff]
    %v2302 = vld [vmem:[#allocation8 + $0x60] sm:$0xff]
    %v2303 = vld [vmem:[#allocation8 + $0x68] sm:$0xff]
    %v2304 = vld [vmem:[#allocation8 + $0x70] sm:$0xff]
    %v2305 = vld [vmem:[#allocation8 + $0x78] sm:$0xff]
    %v2306 = vld [vmem:[#allocation8 + $0x80] sm:$0xff]
    %v2307 = vld [vmem:[#allocation8 + $0x88] sm:$0xff]
    %v2308 = vld [vmem:[#allocation8 + $0x90] sm:$0xff]
    %v2309 = vld [vmem:[#allocation8 + $0x98] sm:$0xff]
    %v2310 = vld [vmem:[#allocation8 + $0xa0] sm:$0xff]
    %v2311 = vld [vmem:[#allocation8 + $0xa8] sm:$0xff]
    %v2312 = vld [vmem:[#allocation8 + $0xb0] sm:$0xff]
    %v2313 = vld [vmem:[#allocation8 + $0xb8] sm:$0xff]
    %v2314 = vld [vmem:[#allocation8 + $0xc0] sm:$0xff]
    %v2315 = vld [vmem:[#allocation8 + $0xc8] sm:$0xff]
    %v2316 = vld [vmem:[#allocation8 + $0xd0] sm:$0xff]
    %v2317 = vld [vmem:[#allocation8 + $0xd8] sm:$0xff]
    %v2318 = vld [vmem:[#allocation8 + $0xe0] sm:$0xff]
    %v2319 = vld [vmem:[#allocation8 + $0xe8] sm:$0xff]
    %v2320 = vld [vmem:[#allocation8 + $0xf0] sm:$0xff]
    %v2321 = vld [vmem:[#allocation8 + $0xf8] sm:$0xff]
    %v2322 = vld [vmem:[#allocation8 + $0x100] sm:$0xff]
    %v2323 = vld [vmem:[#allocation8 + $0x108] sm:$0xff]
    %v2324 = vld [vmem:[#allocation8 + $0x110] sm:$0xff]
    %v2325 = vld [vmem:[#allocation8 + $0x118] sm:$0xff]
    %v2326 = vld [vmem:[#allocation8 + $0x120] sm:$0xff]
    %v2327 = vld [vmem:[#allocation8 + $0x128] sm:$0xff]
    %v2328 = vld [vmem:[#allocation8 + $0x130] sm:$0xff]
    %v2329 = vld [vmem:[#allocation8 + $0x138] sm:$0xff]
    %v2330 = vld [vmem:[#allocation8 + $0x140] sm:$0xff]
    %v2331 = vld [vmem:[#allocation8 + $0x148] sm:$0xff]
    %v2332 = vld [vmem:[#allocation8 + $0x150] sm:$0xff]
    %v2333 = vld [vmem:[#allocation8 + $0x158] sm:$0xff]
    %v2334 = vld [vmem:[#allocation8 + $0x160] sm:$0xff]
    %v2335 = vld [vmem:[#allocation8 + $0x168] sm:$0xff]
    %v2336 = vld [vmem:[#allocation8 + $0x170] sm:$0xff]
    %v2337 = vld [vmem:[#allocation8 + $0x178] sm:$0xff]
    %v2338 = vld [vmem:[#allocation8 + $0x180] sm:$0xff]
    %v2339 = vld [vmem:[#allocation8 + $0x188] sm:$0xff]
    %v2340 = vld [vmem:[#allocation8 + $0x190] sm:$0xff]
    %v2341 = vld [vmem:[#allocation8 + $0x198] sm:$0xff]
    %v2342 = vld [vmem:[#allocation8 + $0x1a0] sm:$0xff]
    %v2343 = vld [vmem:[#allocation8 + $0x1a8] sm:$0xff]
    %v2344 = vld [vmem:[#allocation8 + $0x1b0] sm:$0xff]
    %v2345 = vld [vmem:[#allocation8 + $0x1b8] sm:$0xff]
    %v2346 = vld [vmem:[#allocation8 + $0x1c0] sm:$0xff]
    %v2347 = vld [vmem:[#allocation8 + $0x1c8] sm:$0xff]
    %v2348 = vld [vmem:[#allocation8 + $0x1d0] sm:$0xff]
    %v2349 = vld [vmem:[#allocation8 + $0x1d8] sm:$0xff]
    %v2350 = vld [vmem:[#allocation8 + $0x1e0] sm:$0xff]
    %v2351 = vld [vmem:[#allocation8 + $0x1e8] sm:$0xff]
    %v2352 = vld [vmem:[#allocation8 + $0x1f0] sm:$0xff]
    %v2353 = vld [vmem:[#allocation8 + $0x1f8] sm:$0xff]
    %v2354 = vld [vmem:[#allocation8 + $0x200] sm:$0xff]
    %v2355 = vld [vmem:[#allocation8 + $0x208] sm:$0xff]
    %v2356 = vld [vmem:[#allocation8 + $0x210] sm:$0xff]
    %v2357 = vld [vmem:[#allocation8 + $0x218] sm:$0xff]
    %v2358 = vld [vmem:[#allocation8 + $0x220] sm:$0xff]
    %v2359 = vld [vmem:[#allocation8 + $0x228] sm:$0xff]
    %v2360 = vld [vmem:[#allocation8 + $0x230] sm:$0xff]
    %v2361 = vld [vmem:[#allocation8 + $0x238] sm:$0xff]
    %v2362 = vld [vmem:[#allocation8 + $0x240] sm:$0xff]
    %v2363 = vld [vmem:[#allocation8 + $0x248] sm:$0xff]
    %v2364 = vld [vmem:[#allocation8 + $0x250] sm:$0xff]
    %v2365 = vld [vmem:[#allocation8 + $0x258] sm:$0xff]
    %v2366 = vld [vmem:[#allocation8 + $0x260] sm:$0xff]
    %v2367 = vld [vmem:[#allocation8 + $0x268] sm:$0xff]
    %v2368 = vld [vmem:[#allocation8 + $0x270] sm:$0xff]
    %v2369 = vld [vmem:[#allocation8 + $0x278] sm:$0xff]
    %v2370 = vld [vmem:[#allocation8 + $0x280] sm:$0xff]
    %v2371 = vld [vmem:[#allocation8 + $0x288] sm:$0xff]
    %v2372 = vld [vmem:[#allocation8 + $0x290] sm:$0xff]
    %v2373 = vld [vmem:[#allocation8 + $0x298] sm:$0xff]
    %v2374 = vld [vmem:[#allocation8 + $0x2a0] sm:$0xff]
    %v2375 = vld [vmem:[#allocation8 + $0x2a8] sm:$0xff]
    %v2376 = vld [vmem:[#allocation8 + $0x2b0] sm:$0xff]
    %v2377 = vld [vmem:[#allocation8 + $0x2b8] sm:$0xff]
    %v2378 = vld [vmem:[#allocation8 + $0x2c0] sm:$0xff]
    %v2379 = vld [vmem:[#allocation8 + $0x2c8] sm:$0xff]
    %v2380 = vld [vmem:[#allocation8 + $0x2d0] sm:$0xff]
    %v2381 = vld [vmem:[#allocation8 + $0x2d8] sm:$0xff]
    %v2382 = vld [vmem:[#allocation8 + $0x2e0] sm:$0xff]
    %v2383 = vld [vmem:[#allocation8 + $0x2e8] sm:$0xff]
    %v2384 = vld [vmem:[#allocation8 + $0x2f0] sm:$0xff]
    %v2385 = vld [vmem:[#allocation8 + $0x2f8] sm:$0xff]
    %v2386 = vld [vmem:[#allocation10] sm:$0x3]
    %v2388 = vlaneseq
    %v2389 = vshrl.u32 %v2388, 7
    %v2390 = vsub.s32 0, %v2389
    %v2391 = vrot.slane %v2386, %v2390
    %v2392 = vlaneseq
    %v2393 = vshrl.u32 %v2392, 7
    %v2394 = vsub.s32 1, %v2393
    %v2395 = vrot.slane %v2386, %v2394
    %v2494 = vunpack.c.l.b16 %v2290
    %v2495 = vunpack.c.h.b16 %v2290
    %v2496 = vunpack.c.l.b16 %v2291
    %v2497 = vunpack.c.h.b16 %v2291
    %v2498 = vunpack.c.l.b16 %v2292
    %v2499 = vunpack.c.h.b16 %v2292
    %v2500 = vunpack.c.l.b16 %v2293
    %v2501 = vunpack.c.h.b16 %v2293
    %v2502 = vunpack.c.l.b16 %v2294
    %v2503 = vunpack.c.h.b16 %v2294
    %v2504 = vunpack.c.l.b16 %v2295
    %v2505 = vunpack.c.h.b16 %v2295
    %v2506 = vunpack.c.l.b16 %v2296
    %v2507 = vunpack.c.h.b16 %v2296
    %v2508 = vunpack.c.l.b16 %v2297
    %v2509 = vunpack.c.h.b16 %v2297
    %v2510 = vunpack.c.l.b16 %v2298
    %v2511 = vunpack.c.h.b16 %v2298
    %v2512 = vunpack.c.l.b16 %v2299
    %v2513 = vunpack.c.h.b16 %v2299
    %v2514 = vunpack.c.l.b16 %v2300
    %v2515 = vunpack.c.h.b16 %v2300
    %v2516 = vunpack.c.l.b16 %v2301
    %v2517 = vunpack.c.h.b16 %v2301
    %v2518 = vunpack.c.l.b16 %v2302
    %v2519 = vunpack.c.h.b16 %v2302
    %v2520 = vunpack.c.l.b16 %v2303
    %v2521 = vunpack.c.h.b16 %v2303
    %v2522 = vunpack.c.l.b16 %v2304
    %v2523 = vunpack.c.h.b16 %v2304
    %v2524 = vunpack.c.l.b16 %v2305
    %v2525 = vunpack.c.h.b16 %v2305
    %v2526 = vunpack.c.l.b16 %v2306
    %v2527 = vunpack.c.h.b16 %v2306
    %v2528 = vunpack.c.l.b16 %v2307
    %v2529 = vunpack.c.h.b16 %v2307
    %v2530 = vunpack.c.l.b16 %v2308
    %v2531 = vunpack.c.h.b16 %v2308
    %v2532 = vunpack.c.l.b16 %v2309
    %v2533 = vunpack.c.h.b16 %v2309
    %v2534 = vunpack.c.l.b16 %v2310
    %v2535 = vunpack.c.h.b16 %v2310
    %v2536 = vunpack.c.l.b16 %v2311
    %v2537 = vunpack.c.h.b16 %v2311
    %v2538 = vunpack.c.l.b16 %v2312
    %v2539 = vunpack.c.h.b16 %v2312
    %v2540 = vunpack.c.l.b16 %v2313
    %v2541 = vunpack.c.h.b16 %v2313
    %v2542 = vunpack.c.l.b16 %v2314
    %v2543 = vunpack.c.h.b16 %v2314
    %v2544 = vunpack.c.l.b16 %v2315
    %v2545 = vunpack.c.h.b16 %v2315
    %v2546 = vunpack.c.l.b16 %v2316
    %v2547 = vunpack.c.h.b16 %v2316
    %v2548 = vunpack.c.l.b16 %v2317
    %v2549 = vunpack.c.h.b16 %v2317
    %v2550 = vunpack.c.l.b16 %v2318
    %v2551 = vunpack.c.h.b16 %v2318
    %v2552 = vunpack.c.l.b16 %v2319
    %v2553 = vunpack.c.h.b16 %v2319
    %v2554 = vunpack.c.l.b16 %v2320
    %v2555 = vunpack.c.h.b16 %v2320
    %v2556 = vunpack.c.l.b16 %v2321
    %v2557 = vunpack.c.h.b16 %v2321
    %v2558 = vunpack.c.l.b16 %v2322
    %v2559 = vunpack.c.h.b16 %v2322
    %v2560 = vunpack.c.l.b16 %v2323
    %v2561 = vunpack.c.h.b16 %v2323
    %v2562 = vunpack.c.l.b16 %v2324
    %v2563 = vunpack.c.h.b16 %v2324
    %v2564 = vunpack.c.l.b16 %v2325
    %v2565 = vunpack.c.h.b16 %v2325
    %v2566 = vunpack.c.l.b16 %v2326
    %v2567 = vunpack.c.h.b16 %v2326
    %v2568 = vunpack.c.l.b16 %v2327
    %v2569 = vunpack.c.h.b16 %v2327
    %v2570 = vunpack.c.l.b16 %v2328
    %v2571 = vunpack.c.h.b16 %v2328
    %v2572 = vunpack.c.l.b16 %v2329
    %v2573 = vunpack.c.h.b16 %v2329
    %v2574 = vunpack.c.l.b16 %v2330
    %v2575 = vunpack.c.h.b16 %v2330
    %v2576 = vunpack.c.l.b16 %v2331
    %v2577 = vunpack.c.h.b16 %v2331
    %v2578 = vunpack.c.l.b16 %v2332
    %v2579 = vunpack.c.h.b16 %v2332
    %v2580 = vunpack.c.l.b16 %v2333
    %v2581 = vunpack.c.h.b16 %v2333
    %v2582 = vunpack.c.l.b16 %v2334
    %v2583 = vunpack.c.h.b16 %v2334
    %v2584 = vunpack.c.l.b16 %v2335
    %v2585 = vunpack.c.h.b16 %v2335
    %v2586 = vunpack.c.l.b16 %v2336
    %v2587 = vunpack.c.h.b16 %v2336
    %v2588 = vunpack.c.l.b16 %v2337
    %v2589 = vunpack.c.h.b16 %v2337
    %v2590 = vunpack.c.l.b16 %v2338
    %v2591 = vunpack.c.h.b16 %v2338
    %v2592 = vunpack.c.l.b16 %v2339
    %v2593 = vunpack.c.h.b16 %v2339
    %v2594 = vunpack.c.l.b16 %v2340
    %v2595 = vunpack.c.h.b16 %v2340
    %v2596 = vunpack.c.l.b16 %v2341
    %v2597 = vunpack.c.h.b16 %v2341
    %v2598 = vunpack.c.l.b16 %v2342
    %v2599 = vunpack.c.h.b16 %v2342
    %v2600 = vunpack.c.l.b16 %v2343
    %v2601 = vunpack.c.h.b16 %v2343
    %v2602 = vunpack.c.l.b16 %v2344
    %v2603 = vunpack.c.h.b16 %v2344
    %v2604 = vunpack.c.l.b16 %v2345
    %v2605 = vunpack.c.h.b16 %v2345
    %v2606 = vunpack.c.l.b16 %v2346
    %v2607 = vunpack.c.h.b16 %v2346
    %v2608 = vunpack.c.l.b16 %v2347
    %v2609 = vunpack.c.h.b16 %v2347
    %v2610 = vunpack.c.l.b16 %v2348
    %v2611 = vunpack.c.h.b16 %v2348
    %v2612 = vunpack.c.l.b16 %v2349
    %v2613 = vunpack.c.h.b16 %v2349
    %v2614 = vunpack.c.l.b16 %v2350
    %v2615 = vunpack.c.h.b16 %v2350
    %v2616 = vunpack.c.l.b16 %v2351
    %v2617 = vunpack.c.h.b16 %v2351
    %v2618 = vunpack.c.l.b16 %v2352
    %v2619 = vunpack.c.h.b16 %v2352
    %v2620 = vunpack.c.l.b16 %v2353
    %v2621 = vunpack.c.h.b16 %v2353
    %v2622 = vunpack.c.l.b16 %v2354
    %v2623 = vunpack.c.h.b16 %v2354
    %v2624 = vunpack.c.l.b16 %v2355
    %v2625 = vunpack.c.h.b16 %v2355
    %v2626 = vunpack.c.l.b16 %v2356
    %v2627 = vunpack.c.h.b16 %v2356
    %v2628 = vunpack.c.l.b16 %v2357
    %v2629 = vunpack.c.h.b16 %v2357
    %v2630 = vunpack.c.l.b16 %v2358
    %v2631 = vunpack.c.h.b16 %v2358
    %v2632 = vunpack.c.l.b16 %v2359
    %v2633 = vunpack.c.h.b16 %v2359
    %v2634 = vunpack.c.l.b16 %v2360
    %v2635 = vunpack.c.h.b16 %v2360
    %v2636 = vunpack.c.l.b16 %v2361
    %v2637 = vunpack.c.h.b16 %v2361
    %v2638 = vunpack.c.l.b16 %v2362
    %v2639 = vunpack.c.h.b16 %v2362
    %v2640 = vunpack.c.l.b16 %v2363
    %v2641 = vunpack.c.h.b16 %v2363
    %v2642 = vunpack.c.l.b16 %v2364
    %v2643 = vunpack.c.h.b16 %v2364
    %v2644 = vunpack.c.l.b16 %v2365
    %v2645 = vunpack.c.h.b16 %v2365
    %v2646 = vunpack.c.l.b16 %v2366
    %v2647 = vunpack.c.h.b16 %v2366
    %v2648 = vunpack.c.l.b16 %v2367
    %v2649 = vunpack.c.h.b16 %v2367
    %v2650 = vunpack.c.l.b16 %v2368
    %v2651 = vunpack.c.h.b16 %v2368
    %v2652 = vunpack.c.l.b16 %v2369
    %v2653 = vunpack.c.h.b16 %v2369
    %v2654 = vunpack.c.l.b16 %v2370
    %v2655 = vunpack.c.h.b16 %v2370
    %v2656 = vunpack.c.l.b16 %v2371
    %v2657 = vunpack.c.h.b16 %v2371
    %v2658 = vunpack.c.l.b16 %v2372
    %v2659 = vunpack.c.h.b16 %v2372
    %v2660 = vunpack.c.l.b16 %v2373
    %v2661 = vunpack.c.h.b16 %v2373
    %v2662 = vunpack.c.l.b16 %v2374
    %v2663 = vunpack.c.h.b16 %v2374
    %v2664 = vunpack.c.l.b16 %v2375
    %v2665 = vunpack.c.h.b16 %v2375
    %v2666 = vunpack.c.l.b16 %v2376
    %v2667 = vunpack.c.h.b16 %v2376
    %v2668 = vunpack.c.l.b16 %v2377
    %v2669 = vunpack.c.h.b16 %v2377
    %v2670 = vunpack.c.l.b16 %v2378
    %v2671 = vunpack.c.h.b16 %v2378
    %v2672 = vunpack.c.l.b16 %v2379
    %v2673 = vunpack.c.h.b16 %v2379
    %v2674 = vunpack.c.l.b16 %v2380
    %v2675 = vunpack.c.h.b16 %v2380
    %v2676 = vunpack.c.l.b16 %v2381
    %v2677 = vunpack.c.h.b16 %v2381
    %v2678 = vunpack.c.l.b16 %v2382
    %v2679 = vunpack.c.h.b16 %v2382
    %v2680 = vunpack.c.l.b16 %v2383
    %v2681 = vunpack.c.h.b16 %v2383
    %v2682 = vunpack.c.l.b16 %v2384
    %v2683 = vunpack.c.h.b16 %v2384
    %v2684 = vunpack.c.l.b16 %v2385
    %v2685 = vunpack.c.h.b16 %v2385
    %v2686 = vpack.c.b16 %v2496, %v2494
    %v2687 = vpack.c.b16 %v2497, %v2495
    %v2688 = vpack.c.b16 %v2500, %v2498
    %v2689 = vpack.c.b16 %v2501, %v2499
    %v2690 = vpack.c.b16 %v2504, %v2502
    %v2691 = vpack.c.b16 %v2505, %v2503
    %v2692 = vpack.c.b16 %v2508, %v2506
    %v2693 = vpack.c.b16 %v2509, %v2507
    %v2694 = vpack.c.b16 %v2512, %v2510
    %v2695 = vpack.c.b16 %v2513, %v2511
    %v2696 = vpack.c.b16 %v2516, %v2514
    %v2697 = vpack.c.b16 %v2517, %v2515
    %v2698 = vpack.c.b16 %v2520, %v2518
    %v2699 = vpack.c.b16 %v2521, %v2519
    %v2700 = vpack.c.b16 %v2524, %v2522
    %v2701 = vpack.c.b16 %v2525, %v2523
    %v2702 = vpack.c.b16 %v2528, %v2526
    %v2703 = vpack.c.b16 %v2529, %v2527
    %v2704 = vpack.c.b16 %v2532, %v2530
    %v2705 = vpack.c.b16 %v2533, %v2531
    %v2706 = vpack.c.b16 %v2536, %v2534
    %v2707 = vpack.c.b16 %v2537, %v2535
    %v2708 = vpack.c.b16 %v2540, %v2538
    %v2709 = vpack.c.b16 %v2541, %v2539
    %v2710 = vpack.c.b16 %v2544, %v2542
    %v2711 = vpack.c.b16 %v2545, %v2543
    %v2712 = vpack.c.b16 %v2548, %v2546
    %v2713 = vpack.c.b16 %v2549, %v2547
    %v2714 = vpack.c.b16 %v2552, %v2550
    %v2715 = vpack.c.b16 %v2553, %v2551
    %v2716 = vpack.c.b16 %v2556, %v2554
    %v2717 = vpack.c.b16 %v2557, %v2555
    %v2718 = vpack.c.b16 %v2560, %v2558
    %v2719 = vpack.c.b16 %v2561, %v2559
    %v2720 = vpack.c.b16 %v2564, %v2562
    %v2721 = vpack.c.b16 %v2565, %v2563
    %v2722 = vpack.c.b16 %v2568, %v2566
    %v2723 = vpack.c.b16 %v2569, %v2567
    %v2724 = vpack.c.b16 %v2572, %v2570
    %v2725 = vpack.c.b16 %v2573, %v2571
    %v2726 = vpack.c.b16 %v2576, %v2574
    %v2727 = vpack.c.b16 %v2577, %v2575
    %v2728 = vpack.c.b16 %v2580, %v2578
    %v2729 = vpack.c.b16 %v2581, %v2579
    %v2730 = vpack.c.b16 %v2584, %v2582
    %v2731 = vpack.c.b16 %v2585, %v2583
    %v2732 = vpack.c.b16 %v2588, %v2586
    %v2733 = vpack.c.b16 %v2589, %v2587
    %v2734 = vpack.c.b16 %v2592, %v2590
    %v2735 = vpack.c.b16 %v2593, %v2591
    %v2736 = vpack.c.b16 %v2596, %v2594
    %v2737 = vpack.c.b16 %v2597, %v2595
    %v2738 = vpack.c.b16 %v2600, %v2598
    %v2739 = vpack.c.b16 %v2601, %v2599
    %v2740 = vpack.c.b16 %v2604, %v2602
    %v2741 = vpack.c.b16 %v2605, %v2603
    %v2742 = vpack.c.b16 %v2608, %v2606
    %v2743 = vpack.c.b16 %v2609, %v2607
    %v2744 = vpack.c.b16 %v2612, %v2610
    %v2745 = vpack.c.b16 %v2613, %v2611
    %v2746 = vpack.c.b16 %v2616, %v2614
    %v2747 = vpack.c.b16 %v2617, %v2615
    %v2748 = vpack.c.b16 %v2620, %v2618
    %v2749 = vpack.c.b16 %v2621, %v2619
    %v2750 = vpack.c.b16 %v2624, %v2622
    %v2751 = vpack.c.b16 %v2625, %v2623
    %v2752 = vpack.c.b16 %v2628, %v2626
    %v2753 = vpack.c.b16 %v2629, %v2627
    %v2754 = vpack.c.b16 %v2632, %v2630
    %v2755 = vpack.c.b16 %v2633, %v2631
    %v2756 = vpack.c.b16 %v2636, %v2634
    %v2757 = vpack.c.b16 %v2637, %v2635
    %v2758 = vpack.c.b16 %v2640, %v2638
    %v2759 = vpack.c.b16 %v2641, %v2639
    %v2760 = vpack.c.b16 %v2644, %v2642
    %v2761 = vpack.c.b16 %v2645, %v2643
    %v2762 = vpack.c.b16 %v2648, %v2646
    %v2763 = vpack.c.b16 %v2649, %v2647
    %v2764 = vpack.c.b16 %v2652, %v2650
    %v2765 = vpack.c.b16 %v2653, %v2651
    %v2766 = vpack.c.b16 %v2656, %v2654
    %v2767 = vpack.c.b16 %v2657, %v2655
    %v2768 = vpack.c.b16 %v2660, %v2658
    %v2769 = vpack.c.b16 %v2661, %v2659
    %v2770 = vpack.c.b16 %v2664, %v2662
    %v2771 = vpack.c.b16 %v2665, %v2663
    %v2772 = vpack.c.b16 %v2668, %v2666
    %v2773 = vpack.c.b16 %v2669, %v2667
    %v2774 = vpack.c.b16 %v2672, %v2670
    %v2775 = vpack.c.b16 %v2673, %v2671
    %v2776 = vpack.c.b16 %v2676, %v2674
    %v2777 = vpack.c.b16 %v2677, %v2675
    %v2778 = vpack.c.b16 %v2680, %v2678
    %v2779 = vpack.c.b16 %v2681, %v2679
    %v2780 = vpack.c.b16 %v2684, %v2682
    %v2781 = vpack.c.b16 %v2685, %v2683
    %2878 = vmatprep.subr.bf16.mxu0 %v2701
    %2879 = vmatpush1.bf16.msra.mxu0 %v2700
    %2880 = vmatprep.subr.bf16.mxu0 %v2699
    %2881 = vmatpush1.bf16.msra.mxu0 %v2698
    %2882 = vmatprep.subr.bf16.mxu0 %v2697
    %2883 = vmatpush1.bf16.msra.mxu0 %v2696
    %2884 = vmatprep.subr.bf16.mxu0 %v2695
    %2885 = vmatpush1.bf16.msra.mxu0 %v2694
    %2886 = vmatprep.subr.bf16.mxu0 %v2693
    %2887 = vmatpush1.bf16.msra.mxu0 %v2692
    %2888 = vmatprep.subr.bf16.mxu0 %v2691
    %2889 = vmatpush1.bf16.msra.mxu0 %v2690
    %2890 = vmatprep.subr.bf16.mxu0 %v2689
    %2891 = vmatpush1.bf16.msra.mxu0 %v2688
    %2892 = vmatprep.subr.bf16.mxu0 %v2687
    %2893 = vmatpush1.bf16.msra.mxu0 %v2686
    %2894 = vmatprep.subr.bf16.mxu0 %v2717
    %2895 = vmatpush2.bf16.msra.mxu0 %v2716
    %2896 = vmatprep.subr.bf16.mxu0 %v2715
    %2897 = vmatpush2.bf16.msra.mxu0 %v2714
    %2898 = vmatprep.subr.bf16.mxu0 %v2713
    %2899 = vmatpush2.bf16.msra.mxu0 %v2712
    %2900 = vmatprep.subr.bf16.mxu0 %v2711
    %2901 = vmatpush2.bf16.msra.mxu0 %v2710
    %2902 = vmatprep.subr.bf16.mxu0 %v2709
    %2903 = vmatpush2.bf16.msra.mxu0 %v2708
    %2904 = vmatprep.subr.bf16.mxu0 %v2707
    %2905 = vmatpush2.bf16.msra.mxu0 %v2706
    %2906 = vmatprep.subr.bf16.mxu0 %v2705
    %2907 = vmatpush2.bf16.msra.mxu0 %v2704
    %2908 = vmatprep.subr.bf16.mxu0 %v2703
    %2909 = vmatpush2.bf16.msra.mxu0 %v2702
    %2910 = vmatprep.mubr.bf16.mxu0 %v2285
    %2911 = vmatmul.mubr.bf16.gmra.mxu0 %v2284
    %v2912 = vpop.f32.mrf.mxu0
    %v2913 = vadd.f32 %v2391, %v2912
    %v2914 = vpop.f32.mrf.mxu0
    %v2915 = vadd.f32 %v2395, %v2914
    %v2916 = vpop.f32.mrf.mxu0
    %v2917 = vpop.f32.mrf.mxu0
    %2918 = vdwg.mxu0
    %2919 = vmatprep.subr.bf16.mxu0 %v2733
    %2920 = vmatpush1.bf16.msra.mxu0 %v2732
    %2921 = vmatprep.subr.bf16.mxu0 %v2731
    %2922 = vmatpush1.bf16.msra.mxu0 %v2730
    %2923 = vmatprep.subr.bf16.mxu0 %v2729
    %2924 = vmatpush1.bf16.msra.mxu0 %v2728
    %2925 = vmatprep.subr.bf16.mxu0 %v2727
    %2926 = vmatpush1.bf16.msra.mxu0 %v2726
    %2927 = vmatprep.subr.bf16.mxu0 %v2725
    %2928 = vmatpush1.bf16.msra.mxu0 %v2724
    %2929 = vmatprep.subr.bf16.mxu0 %v2723
    %2930 = vmatpush1.bf16.msra.mxu0 %v2722
    %2931 = vmatprep.subr.bf16.mxu0 %v2721
    %2932 = vmatpush1.bf16.msra.mxu0 %v2720
    %2933 = vmatprep.subr.bf16.mxu0 %v2719
    %2934 = vmatpush1.bf16.msra.mxu0 %v2718
    %2935 = vmatprep.subr.bf16.mxu0 %v2749
    %2936 = vmatpush2.bf16.msra.mxu0 %v2748
    %2937 = vmatprep.subr.bf16.mxu0 %v2747
    %2938 = vmatpush2.bf16.msra.mxu0 %v2746
    %2939 = vmatprep.subr.bf16.mxu0 %v2745
    %2940 = vmatpush2.bf16.msra.mxu0 %v2744
    %2941 = vmatprep.subr.bf16.mxu0 %v2743
    %2942 = vmatpush2.bf16.msra.mxu0 %v2742
    %2943 = vmatprep.subr.bf16.mxu0 %v2741
    %2944 = vmatpush2.bf16.msra.mxu0 %v2740
    %2945 = vmatprep.subr.bf16.mxu0 %v2739
    %2946 = vmatpush2.bf16.msra.mxu0 %v2738
    %2947 = vmatprep.subr.bf16.mxu0 %v2737
    %2948 = vmatpush2.bf16.msra.mxu0 %v2736
    %2949 = vmatprep.subr.bf16.mxu0 %v2735
    %2950 = vmatpush2.bf16.msra.mxu0 %v2734
    %2951 = vmatprep.mubr.bf16.mxu0 %v2287
    %2952 = vmatmul.mubr.bf16.gmra.mxu0 %v2286
    %v2953 = vpop.f32.mrf.mxu0
    %v2954 = vadd.f32 %v2913, %v2953
    %v2955 = vpop.f32.mrf.mxu0
    %v2956 = vadd.f32 %v2915, %v2955
    %v2957 = vpop.f32.mrf.mxu0
    %v2958 = vpop.f32.mrf.mxu0
    %2959 = vdwg.mxu0
    %2960 = vmatprep.subr.bf16.mxu0 %v2765
    %2961 = vmatpush1.bf16.msra.mxu0 %v2764
    %2962 = vmatprep.subr.bf16.mxu0 %v2763
    %2963 = vmatpush1.bf16.msra.mxu0 %v2762
    %2964 = vmatprep.subr.bf16.mxu0 %v2761
    %2965 = vmatpush1.bf16.msra.mxu0 %v2760
    %2966 = vmatprep.subr.bf16.mxu0 %v2759
    %2967 = vmatpush1.bf16.msra.mxu0 %v2758
    %2968 = vmatprep.subr.bf16.mxu0 %v2757
    %2969 = vmatpush1.bf16.msra.mxu0 %v2756
    %2970 = vmatprep.subr.bf16.mxu0 %v2755
    %2971 = vmatpush1.bf16.msra.mxu0 %v2754
    %2972 = vmatprep.subr.bf16.mxu0 %v2753
    %2973 = vmatpush1.bf16.msra.mxu0 %v2752
    %2974 = vmatprep.subr.bf16.mxu0 %v2751
    %2975 = vmatpush1.bf16.msra.mxu0 %v2750
    %2976 = vmatprep.subr.bf16.mxu0 %v2781
    %2977 = vmatpush2.bf16.msra.mxu0 %v2780
    %2978 = vmatprep.subr.bf16.mxu0 %v2779
    %2979 = vmatpush2.bf16.msra.mxu0 %v2778
    %2980 = vmatprep.subr.bf16.mxu0 %v2777
    %2981 = vmatpush2.bf16.msra.mxu0 %v2776
    %2982 = vmatprep.subr.bf16.mxu0 %v2775
    %2983 = vmatpush2.bf16.msra.mxu0 %v2774
    %2984 = vmatprep.subr.bf16.mxu0 %v2773
    %2985 = vmatpush2.bf16.msra.mxu0 %v2772
    %2986 = vmatprep.subr.bf16.mxu0 %v2771
    %2987 = vmatpush2.bf16.msra.mxu0 %v2770
    %2988 = vmatprep.subr.bf16.mxu0 %v2769
    %2989 = vmatpush2.bf16.msra.mxu0 %v2768
    %2990 = vmatprep.subr.bf16.mxu0 %v2767
    %2991 = vmatpush2.bf16.msra.mxu0 %v2766
    %2992 = vmatprep.mubr.bf16.mxu0 %v2289
    %2993 = vmatmul.mubr.bf16.gmra.mxu0 %v2288
    %v2994 = vpop.f32.mrf.mxu0
    %v2995 = vadd.f32 %v2954, %v2994
    %v2996 = vpop.f32.mrf.mxu0
    %v2997 = vadd.f32 %v2956, %v2996
    %v2998 = vpop.f32.mrf.mxu0
    %v2999 = vpop.f32.mrf.mxu0
    %3000 = vdwg.mxu0
    %v3001 = vpack.c.bf16 %v2995, %v2995
    %v3002 = vpack.c.bf16 %v2997, %v2997
    %v3003 = vld [vmem:[#allocation11] sm:$0xf]
    %v3004 = vld [vmem:[#allocation11 + $0x4] sm:$0xf]
    %v3005 = vld [vmem:[#allocation11 + $0x8] sm:$0xf]
    %v3006 = vld [vmem:[#allocation11 + $0xc] sm:$0xf]
    %v3007 = vld [vmem:[#allocation11 + $0x10] sm:$0xf]
    %v3008 = vld [vmem:[#allocation11 + $0x14] sm:$0xf]
    %v3009 = vld [vmem:[#allocation11 + $0x18] sm:$0xf]
    %v3010 = vld [vmem:[#allocation11 + $0x1c] sm:$0xf]
    %v3011 = vld [vmem:[#allocation11 + $0x20] sm:$0xf]
    %v3012 = vld [vmem:[#allocation11 + $0x24] sm:$0xf]
    %v3013 = vld [vmem:[#allocation11 + $0x28] sm:$0xf]
    %v3014 = vld [vmem:[#allocation11 + $0x2c] sm:$0xf]
    %v3015 = vld [vmem:[#allocation11 + $0x30] sm:$0xf]
    %v3016 = vld [vmem:[#allocation11 + $0x34] sm:$0xf]
    %v3017 = vld [vmem:[#allocation11 + $0x38] sm:$0xf]
    %v3018 = vld [vmem:[#allocation11 + $0x3c] sm:$0xf]
    %v3019 = vld [vmem:[#allocation11 + $0x40] sm:$0xf]
    %v3020 = vld [vmem:[#allocation11 + $0x44] sm:$0xf]
    %v3021 = vld [vmem:[#allocation11 + $0x48] sm:$0xf]
    %v3022 = vld [vmem:[#allocation11 + $0x4c] sm:$0xf]
    %v3023 = vld [vmem:[#allocation11 + $0x50] sm:$0xf]
    %v3024 = vld [vmem:[#allocation11 + $0x54] sm:$0xf]
    %v3025 = vld [vmem:[#allocation11 + $0x58] sm:$0xf]
    %v3026 = vld [vmem:[#allocation11 + $0x5c] sm:$0xf]
    %v3027 = vld [vmem:[#allocation11 + $0x60] sm:$0xf]
    %v3028 = vld [vmem:[#allocation11 + $0x64] sm:$0xf]
    %v3029 = vld [vmem:[#allocation11 + $0x68] sm:$0xf]
    %v3030 = vld [vmem:[#allocation11 + $0x6c] sm:$0xf]
    %v3031 = vld [vmem:[#allocation11 + $0x70] sm:$0xf]
    %v3032 = vld [vmem:[#allocation11 + $0x74] sm:$0xf]
    %v3033 = vld [vmem:[#allocation11 + $0x78] sm:$0xf]
    %v3034 = vld [vmem:[#allocation11 + $0x7c] sm:$0xf]
    %v3035 = vld [vmem:[#allocation13] sm:$0x1]
    %v3037 = vlaneseq
    %v3038 = vshrl.u32 %v3037, 7
    %v3039 = vsub.s32 0, %v3038
    %v3040 = vrot.slane %v3035, %v3039
    %v3074 = vunpack.c.l.b16 %v3003
    %v3075 = vunpack.c.l.b16 %v3004
    %v3076 = vunpack.c.l.b16 %v3005
    %v3077 = vunpack.c.l.b16 %v3006
    %v3078 = vunpack.c.l.b16 %v3007
    %v3079 = vunpack.c.l.b16 %v3008
    %v3080 = vunpack.c.l.b16 %v3009
    %v3081 = vunpack.c.l.b16 %v3010
    %v3082 = vunpack.c.l.b16 %v3011
    %v3083 = vunpack.c.l.b16 %v3012
    %v3084 = vunpack.c.l.b16 %v3013
    %v3085 = vunpack.c.l.b16 %v3014
    %v3086 = vunpack.c.l.b16 %v3015
    %v3087 = vunpack.c.l.b16 %v3016
    %v3088 = vunpack.c.l.b16 %v3017
    %v3089 = vunpack.c.l.b16 %v3018
    %v3090 = vunpack.c.l.b16 %v3019
    %v3091 = vunpack.c.l.b16 %v3020
    %v3092 = vunpack.c.l.b16 %v3021
    %v3093 = vunpack.c.l.b16 %v3022
    %v3094 = vunpack.c.l.b16 %v3023
    %v3095 = vunpack.c.l.b16 %v3024
    %v3096 = vunpack.c.l.b16 %v3025
    %v3097 = vunpack.c.l.b16 %v3026
    %v3098 = vunpack.c.l.b16 %v3027
    %v3099 = vunpack.c.l.b16 %v3028
    %v3100 = vunpack.c.l.b16 %v3029
    %v3101 = vunpack.c.l.b16 %v3030
    %v3102 = vunpack.c.l.b16 %v3031
    %v3103 = vunpack.c.l.b16 %v3032
    %v3104 = vunpack.c.l.b16 %v3033
    %v3105 = vunpack.c.l.b16 %v3034
    %v3106 = vpack.c.b16 %v3075, %v3074
    %v3107 = vpack.c.b16 %v3077, %v3076
    %v3108 = vpack.c.b16 %v3079, %v3078
    %v3109 = vpack.c.b16 %v3081, %v3080
    %v3110 = vpack.c.b16 %v3083, %v3082
    %v3111 = vpack.c.b16 %v3085, %v3084
    %v3112 = vpack.c.b16 %v3087, %v3086
    %v3113 = vpack.c.b16 %v3089, %v3088
    %v3114 = vpack.c.b16 %v3091, %v3090
    %v3115 = vpack.c.b16 %v3093, %v3092
    %v3116 = vpack.c.b16 %v3095, %v3094
    %v3117 = vpack.c.b16 %v3097, %v3096
    %v3118 = vpack.c.b16 %v3099, %v3098
    %v3119 = vpack.c.b16 %v3101, %v3100
    %v3120 = vpack.c.b16 %v3103, %v3102
    %v3121 = vpack.c.b16 %v3105, %v3104
    %3138 = vmatprep.subr.bf16.mxu0 0
    %3139 = vmatpush1.bf16.msra.mxu0 %v3113
    %3140 = vmatprep.subr.bf16.mxu0 0
    %3141 = vmatpush1.bf16.msra.mxu0 %v3112
    %3142 = vmatprep.subr.bf16.mxu0 0
    %3143 = vmatpush1.bf16.msra.mxu0 %v3111
    %3144 = vmatprep.subr.bf16.mxu0 0
    %3145 = vmatpush1.bf16.msra.mxu0 %v3110
    %3146 = vmatprep.subr.bf16.mxu0 0
    %3147 = vmatpush1.bf16.msra.mxu0 %v3109
    %3148 = vmatprep.subr.bf16.mxu0 0
    %3149 = vmatpush1.bf16.msra.mxu0 %v3108
    %3150 = vmatprep.subr.bf16.mxu0 0
    %3151 = vmatpush1.bf16.msra.mxu0 %v3107
    %3152 = vmatprep.subr.bf16.mxu0 0
    %3153 = vmatpush1.bf16.msra.mxu0 %v3106
    %3154 = vmatprep.subr.bf16.mxu0 0
    %3155 = vmatpush2.bf16.msra.mxu0 %v3121
    %3156 = vmatprep.subr.bf16.mxu0 0
    %3157 = vmatpush2.bf16.msra.mxu0 %v3120
    %3158 = vmatprep.subr.bf16.mxu0 0
    %3159 = vmatpush2.bf16.msra.mxu0 %v3119
    %3160 = vmatprep.subr.bf16.mxu0 0
    %3161 = vmatpush2.bf16.msra.mxu0 %v3118
    %3162 = vmatprep.subr.bf16.mxu0 0
    %3163 = vmatpush2.bf16.msra.mxu0 %v3117
    %3164 = vmatprep.subr.bf16.mxu0 0
    %3165 = vmatpush2.bf16.msra.mxu0 %v3116
    %3166 = vmatprep.subr.bf16.mxu0 0
    %3167 = vmatpush2.bf16.msra.mxu0 %v3115
    %3168 = vmatprep.subr.bf16.mxu0 0
    %3169 = vmatpush2.bf16.msra.mxu0 %v3114
    %3170 = vmatprep.mubr.bf16.mxu0 %v3002
    %3171 = vmatmul.mubr.bf16.gmra.mxu0 %v3001
    %v3172 = vpop.f32.mrf.mxu0
    %v3173 = vadd.f32 %v3040, %v3172
    %v3174 = vpop.f32.mrf.mxu0
    %v3175 = vpop.f32.mrf.mxu0
    %v3176 = vpop.f32.mrf.mxu0
    %3177 = vdwg.mxu0
    %3178 = vst [vmem:[#allocation14] sm:$0xff] %v3173
    // Predicated region
    $region58: #{tpu_custom_call.1} parent=1 // pred_check
      _
    $region59: #{tpu_custom_call.1} parent=1 // pred_check_branch
      %3180 = sbr.rel (0) target = $region61
    $region60: #{tpu_custom_call.1} parent=1 // pred_region
      %s3182 = ssub.s32 128, 128
      %3183 = vsyncadd [#allocation4], %s3182
      %s3185 = sshll.u32 [#allocation14], 4
      %s3186 = int_to_ptr.vmem [resolvable:$true] %s3185
      %3188 = dma.vmem_to_hbm [thread:$0]  %s3186, 128, %s7, [#allocation4]
    $region61: #{tpu_custom_call.1} parent=1 // pred_fallthru
      _
    // Predicated region
    $region62: #{tpu_custom_call.1} parent=1 // pred_check
      _
    $region63: #{tpu_custom_call.1} parent=1 // pred_check_branch
      %3190 = sbr.rel (0) target = $region65
    $region64: #{tpu_custom_call.1} parent=1 // pred_region
      %3191 = dma.done [#allocation4], 128
    $region65: #{tpu_custom_call.1} parent=1 // pred_fallthru
      _
    %3192 = vsyncpa [#allocation3], 1
    %3193 = vsyncpa [#allocation6], 1
    %3194 = vsyncpa [#allocation9], 1
    %3195 = vsyncpa [#allocation12], 1
    %3196 = vsyncpa [#allocation4], 1

</llo_original>
